<compile_context>
chip_gen: v5e
topology: v5e:2x2
jax: 0.10.0
libtpu: 0.0.40
codegen_flags: <defaults>
</compile_context>

<pallas_src>
from functools import partial

import jax
import jax.numpy as jnp
from jax import lax
from jax.experimental import pallas as pl
from jax.experimental.pallas import tpu as pltpu  # noqa: F401 (kept for TPU-specific params if needed)


def _round_up(n, m):
    return ((n + m - 1) // m) * m


def _make_encoder_kernel(seq, batch, h_dim):
    H = h_dim

    def cell_tail(gates, c):
        # Full-vreg nonlinearities (2 EUP pushes per cell), then lane-slice.
        s = jax.nn.sigmoid(gates)
        th = jnp.tanh(gates)
        i = s[:, 0 * H:1 * H]
        f = s[:, 1 * H:2 * H]
        g = th[:, 2 * H:3 * H]
        o = s[:, 3 * H:4 * H]
        c_new = f * c + i * g
        h_new = o * jnp.tanh(c_new)
        return h_new, c_new

    def kernel(x_ref,                     # (seq*batch, pose_pad)
               w0in_ref, b0_ref,          # (pose_pad, 4H), (1, 4H)
               whh0_ref,                  # (H, 4H)
               wih1_ref, whh1_ref, b1_ref,  # (H, 4H), (H, 4H), (1, 4H)
               whead_ref, bhead_ref,      # (H, head_pad), (1, head_pad)
               out_ref):                  # (batch, head_pad)
        # ---- hoisted layer-0 input projection: one big MXU op, off the
        #      recurrent critical path; stays in vregs (no scratch) ----
        xproj = (jnp.dot(x_ref[...], w0in_ref[...],
                         preferred_element_type=jnp.float32)
                 + b0_ref[...])                                # (seq*batch, 4H)

        # ---- hoist all recurrent weights/biases out of the loop ----
        whh0 = whh0_ref[...]
        wih1 = wih1_ref[...]
        whh1 = whh1_ref[...]
        b1b = jnp.broadcast_to(b1_ref[...], (batch, 4 * H))    # hoisted bcast

        def step(xp_t, carry):
            h0, c0, h1, c1 = carry
            # layer-1 h-recurrence depends only on previous-step h1: issue its
            # MXU push first so it overlaps the layer-0 matmul + cell tail.
            r1 = jnp.dot(h1, whh1, preferred_element_type=jnp.float32) + b1b
            # layer 0: input projection precomputed, only h-recurrence matmul
            gates0 = xp_t + jnp.dot(h0, whh0,
                                    preferred_element_type=jnp.float32)
            h0, c0 = cell_tail(gates0, c0)
            # layer 1: no concat -- split matmul on fresh h0
            gates1 = jnp.dot(h0, wih1,
                             preferred_element_type=jnp.float32) + r1
            h1, c1 = cell_tail(gates1, c1)
            return (h0, c0, h1, c1)

        z = jnp.zeros((batch, H), jnp.float32)   # zero initial states
        carry = (z, z, z, z)

        if seq <= 32:
            # fully static unroll: xproj sliced with constant indices
            for t in range(seq):
                carry = step(xproj[t * batch:(t + 1) * batch, :], carry)
        else:
            # long sequences: partial unroll to bound instruction-stream bloat
            def body(t, carry):
                xp_t = lax.dynamic_slice_in_dim(xproj, t * batch, batch,
                                                axis=0)
                return step(xp_t, carry)
            carry = lax.fori_loop(0, seq, body, carry, unroll=4)

        h1 = carry[2]

        # ---- fused, lane-dense (padded to 128) head store ----
        out_ref[...] = (jnp.dot(h1, whead_ref[...],
                                preferred_element_type=jnp.float32)
                        + bhead_ref[...])

    return kernel


def prepare_encoder_params(params):
    """One-time weight prep (transposes, padding, bias pre-sums)."""
    f32 = jnp.float32

    w_ih0 = jnp.asarray(params["w_ih0"], f32)        # (4H, P)
    four_h, P = w_ih0.shape
    H = four_h // 4
    P_pad = _round_up(P, 64)                          # 39 -> 64

    w0in = jnp.zeros((P_pad, four_h), f32).at[:P, :].set(w_ih0.T)

    w_mean = jnp.asarray(params["w_mean"], f32)       # (L, H)
    w_var = jnp.asarray(params["w_var"], f32)         # (L, H)
    L = w_mean.shape[0]
    head_pad = _round_up(2 * L, 128)                  # 32 -> 128

    whead_full = jnp.concatenate([w_mean.T, w_var.T], axis=1)     # (H, 2L)
    whead = jnp.zeros((H, head_pad), f32).at[:, :2 * L].set(whead_full)
    bhead_full = jnp.concatenate(
        [jnp.asarray(params["b_mean"], f32), jnp.asarray(params["b_var"], f32)])
    bhead = jnp.zeros((1, head_pad), f32).at[0, :2 * L].set(bhead_full)

    return {
        "w0in": w0in,                                              # (Ppad, 4H)
        "b0": (params["b_ih0"] + params["b_hh0"]).astype(f32).reshape(1, -1),
        "whh0": jnp.asarray(params["w_hh0"], f32).T,               # (H, 4H)
        "wih1": jnp.asarray(params["w_ih1"], f32).T,               # (H, 4H)
        "whh1": jnp.asarray(params["w_hh1"], f32).T,               # (H, 4H)
        "b1": (params["b_ih1"] + params["b_hh1"]).astype(f32).reshape(1, -1),
        "whead": whead,                                            # (H, 128)
        "bhead": bhead,                                            # (1, 128)
    }


@partial(jax.jit, static_argnames=("h_dim", "latent_dim"))
def encoder_forward(obs_s, prepped, h_dim, latent_dim):
    seq, batch, pose_dim = obs_s.shape
    pose_pad = prepped["w0in"].shape[0]
    head_pad = prepped["whead"].shape[1]

    x = obs_s.astype(jnp.float32)
    if pose_pad != pose_dim:
        x = jnp.pad(x, ((0, 0), (0, 0), (0, pose_pad - pose_dim)))
    x_flat = x.reshape(seq * batch, pose_pad)

    kernel = _make_encoder_kernel(seq, batch, h_dim)
    head = pl.pallas_call(
        kernel,
        out_shape=jax.ShapeDtypeStruct((batch, head_pad), jnp.float32),
    )(x_flat,
      prepped["w0in"], prepped["b0"],
      prepped["whh0"],
      prepped["wih1"], prepped["whh1"], prepped["b1"],
      prepped["whead"], prepped["bhead"])

    mean = head[:, :latent_dim]
    log_var = head[:, latent_dim:2 * latent_dim]
    return mean, log_var


def _reference_forward(obs_s, params, h_dim):
    """Pure-JAX reference (eval-mode nn.LSTM + Linear heads)."""
    seq, batch, _ = obs_s.shape
    H = h_dim

    def cell(x_t, h, c, w_ih, w_hh, b_ih, b_hh):
        g = x_t @ w_ih.T + h @ w_hh.T + b_ih + b_hh
        i = jax.nn.sigmoid(g[:, 0 * H:1 * H])
        f = jax.nn.sigmoid(g[:, 1 * H:2 * H])
        gg = jnp.tanh(g[:, 2 * H:3 * H])
        o = jax.nn.sigmoid(g[:, 3 * H:4 * H])
        c_new = f * c + i * gg
        return o * jnp.tanh(c_new), c_new

    h0 = c0 = h1 = c1 = jnp.zeros((batch, H), jnp.float32)
    for t in range(seq):
        h0, c0 = cell(obs_s[t], h0, c0, params["w_ih0"], params["w_hh0"],
                      params["b_ih0"], params["b_hh0"])
        h1, c1 = cell(h0, h1, c1, params["w_ih1"], params["w_hh1"],
                      params["b_ih1"], params["b_hh1"])
    mean = h1 @ params["w_mean"].T + params["b_mean"]
    log_var = h1 @ params["w_var"].T + params["b_var"]
    return mean, log_var


if __name__ == "__main__":
    pose_dim, h_dim, latent_dim = 39, 32, 16
    seq, batch = 8, 8   # batch=8 fills all 8 sublanes per vreg / MXU rows

    key = jax.random.PRNGKey(0)
    ks = jax.random.split(key, 13)
    scale = 0.1
    params = {
        "w_ih0": scale * jax.random.normal(ks[0], (4 * h_dim, pose_dim), jnp.float32),
        "w_hh0": scale * jax.random.normal(ks[1], (4 * h_dim, h_dim), jnp.float32),
        "b_ih0": scale * jax.random.normal(ks[2], (4 * h_dim,), jnp.float32),
        "b_hh0": scale * jax.random.normal(ks[3], (4 * h_dim,), jnp.float32),
        "w_ih1": scale * jax.random.normal(ks[4], (4 * h_dim, h_dim), jnp.float32),
        "w_hh1": scale * jax.random.normal(ks[5], (4 * h_dim, h_dim), jnp.float32),
        "b_ih1": scale * jax.random.normal(ks[6], (4 * h_dim,), jnp.float32),
        "b_hh1": scale * jax.random.normal(ks[7], (4 * h_dim,), jnp.float32),
        "w_mean": scale * jax.random.normal(ks[8], (latent_dim, h_dim), jnp.float32),
        "b_mean": scale * jax.random.normal(ks[9], (latent_dim,), jnp.float32),
        "w_var": scale * jax.random.normal(ks[10], (latent_dim, h_dim), jnp.float32),
        "b_var": scale * jax.random.normal(ks[11], (latent_dim,), jnp.float32),
    }

    obs_s = jax.random.normal(ks[12], (seq, batch, pose_dim), jnp.float32)

    prepped = prepare_encoder_params(params)   # one-time weight prep

    mean, log_var = encoder_forward(obs_s, prepped, h_dim, latent_dim)
    jax.block_until_ready((mean, log_var))

    ref_mean, ref_log_var = _reference_forward(obs_s, params, h_dim)
    assert mean.shape == (batch, latent_dim)
    assert log_var.shape == (batch, latent_dim)
    assert jnp.allclose(mean, ref_mean, atol=1e-5, rtol=1e-5)
    assert jnp.allclose(log_var, ref_log_var, atol=1e-5, rtol=1e-5)

    print("KERNEL_OK")
</pallas_src>

<mosaic_0001>
module attributes {stable_mosaic.version = 11 : i64} {
  func.func @kernel(%arg0: memref<64x64xf32, #tpu.memory_space<vmem>>, %arg1: memref<64x128xf32, #tpu.memory_space<vmem>>, %arg2: memref<1x128xf32, #tpu.memory_space<vmem>>, %arg3: memref<32x128xf32, #tpu.memory_space<vmem>>, %arg4: memref<32x128xf32, #tpu.memory_space<vmem>>, %arg5: memref<32x128xf32, #tpu.memory_space<vmem>>, %arg6: memref<1x128xf32, #tpu.memory_space<vmem>>, %arg7: memref<32x128xf32, #tpu.memory_space<vmem>>, %arg8: memref<1x128xf32, #tpu.memory_space<vmem>>, %arg9: memref<8x128xf32, #tpu.memory_space<vmem>>) attributes {dimension_semantics = [], scalar_prefetch = 0 : i64, scratch_operands = 0 : i64, tpu.core_type = #tpu.core_type<tc>} {
    %c0 = arith.constant 0 : index
    %c0_0 = arith.constant 0 : index
    %0 = vector.load %arg0[%c0, %c0_0] : memref<64x64xf32, #tpu.memory_space<vmem>>, vector<64x64xf32>
    %c0_1 = arith.constant 0 : index
    %c0_2 = arith.constant 0 : index
    %1 = vector.load %arg1[%c0_1, %c0_2] : memref<64x128xf32, #tpu.memory_space<vmem>>, vector<64x128xf32>
    %cst = arith.constant dense<0.000000e+00> : vector<64x128xf32>
    %2 = tpu.matmul %0, %1, %cst {dimension_numbers = #tpu.dot_dimension_numbers<[1], [0], [0], [1], [0, 0, 1, 1], [], []>} : vector<64x64xf32>, vector<64x128xf32>, vector<64x128xf32> -> vector<64x128xf32>
    %c0_3 = arith.constant 0 : index
    %c0_4 = arith.constant 0 : index
    %3 = vector.load %arg2[%c0_3, %c0_4] : memref<1x128xf32, #tpu.memory_space<vmem>>, vector<1x128xf32>
    %4 = vector.broadcast %3 : vector<1x128xf32> to vector<64x128xf32>
    %5 = arith.addf %2, %4 : vector<64x128xf32>
    %c0_5 = arith.constant 0 : index
    %c0_6 = arith.constant 0 : index
    %6 = vector.load %arg3[%c0_5, %c0_6] : memref<32x128xf32, #tpu.memory_space<vmem>>, vector<32x128xf32>
    %c0_7 = arith.constant 0 : index
    %c0_8 = arith.constant 0 : index
    %7 = vector.load %arg4[%c0_7, %c0_8] : memref<32x128xf32, #tpu.memory_space<vmem>>, vector<32x128xf32>
    %c0_9 = arith.constant 0 : index
    %c0_10 = arith.constant 0 : index
    %8 = vector.load %arg5[%c0_9, %c0_10] : memref<32x128xf32, #tpu.memory_space<vmem>>, vector<32x128xf32>
    %c0_11 = arith.constant 0 : index
    %c0_12 = arith.constant 0 : index
    %9 = vector.load %arg6[%c0_11, %c0_12] : memref<1x128xf32, #tpu.memory_space<vmem>>, vector<1x128xf32>
    %10 = vector.shape_cast %9 : vector<1x128xf32> to vector<1x128xf32>
    %11 = vector.broadcast %10 : vector<1x128xf32> to vector<8x128xf32>
    %cst_13 = arith.constant 0.000000e+00 : f32
    %12 = vector.broadcast %cst_13 : f32 to vector<8x32xf32>
    %13 = vector.extract_strided_slice %5 {offsets = [0, 0], sizes = [8, 128], strides = [1, 1]} : vector<64x128xf32> to vector<8x128xf32>
    %cst_14 = arith.constant dense<0.000000e+00> : vector<8x128xf32>
    %14 = tpu.matmul %12, %8, %cst_14 {dimension_numbers = #tpu.dot_dimension_numbers<[1], [0], [0], [1], [0, 0, 1, 1], [], []>} : vector<8x32xf32>, vector<32x128xf32>, vector<8x128xf32> -> vector<8x128xf32>
    %15 = arith.addf %14, %11 : vector<8x128xf32>
    %cst_15 = arith.constant dense<0.000000e+00> : vector<8x128xf32>
    %16 = tpu.matmul %12, %6, %cst_15 {dimension_numbers = #tpu.dot_dimension_numbers<[1], [0], [0], [1], [0, 0, 1, 1], [], []>} : vector<8x32xf32>, vector<32x128xf32>, vector<8x128xf32> -> vector<8x128xf32>
    %17 = arith.addf %13, %16 : vector<8x128xf32>
    %18 = arith.negf %17 : vector<8x128xf32>
    %19 = math.exp %18 : vector<8x128xf32>
    %cst_16 = arith.constant 1.000000e+00 : f32
    %20 = vector.broadcast %cst_16 : f32 to vector<8x128xf32>
    %21 = arith.addf %20, %19 : vector<8x128xf32>
    %22 = arith.divf %20, %21 : vector<8x128xf32>
    %23 = math.tanh %17 : vector<8x128xf32>
    %24 = vector.extract_strided_slice %22 {offsets = [0, 0], sizes = [8, 32], strides = [1, 1]} : vector<8x128xf32> to vector<8x32xf32>
    %25 = vector.extract_strided_slice %22 {offsets = [0, 32], sizes = [8, 32], strides = [1, 1]} : vector<8x128xf32> to vector<8x32xf32>
    %26 = vector.extract_strided_slice %23 {offsets = [0, 64], sizes = [8, 32], strides = [1, 1]} : vector<8x128xf32> to vector<8x32xf32>
    %27 = vector.extract_strided_slice %22 {offsets = [0, 96], sizes = [8, 32], strides = [1, 1]} : vector<8x128xf32> to vector<8x32xf32>
    %28 = arith.mulf %25, %12 : vector<8x32xf32>
    %29 = arith.mulf %24, %26 : vector<8x32xf32>
    %30 = arith.addf %28, %29 : vector<8x32xf32>
    %31 = math.tanh %30 : vector<8x32xf32>
    %32 = arith.mulf %27, %31 : vector<8x32xf32>
    %cst_17 = arith.constant dense<0.000000e+00> : vector<8x128xf32>
    %33 = tpu.matmul %32, %7, %cst_17 {dimension_numbers = #tpu.dot_dimension_numbers<[1], [0], [0], [1], [0, 0, 1, 1], [], []>} : vector<8x32xf32>, vector<32x128xf32>, vector<8x128xf32> -> vector<8x128xf32>
    %34 = arith.addf %33, %15 : vector<8x128xf32>
    %35 = arith.negf %34 : vector<8x128xf32>
    %36 = math.exp %35 : vector<8x128xf32>
    %cst_18 = arith.constant 1.000000e+00 : f32
    %37 = vector.broadcast %cst_18 : f32 to vector<8x128xf32>
    %38 = arith.addf %37, %36 : vector<8x128xf32>
    %39 = arith.divf %37, %38 : vector<8x128xf32>
    %40 = math.tanh %34 : vector<8x128xf32>
    %41 = vector.extract_strided_slice %39 {offsets = [0, 0], sizes = [8, 32], strides = [1, 1]} : vector<8x128xf32> to vector<8x32xf32>
    %42 = vector.extract_strided_slice %39 {offsets = [0, 32], sizes = [8, 32], strides = [1, 1]} : vector<8x128xf32> to vector<8x32xf32>
    %43 = vector.extract_strided_slice %40 {offsets = [0, 64], sizes = [8, 32], strides = [1, 1]} : vector<8x128xf32> to vector<8x32xf32>
    %44 = vector.extract_strided_slice %39 {offsets = [0, 96], sizes = [8, 32], strides = [1, 1]} : vector<8x128xf32> to vector<8x32xf32>
    %45 = arith.mulf %42, %12 : vector<8x32xf32>
    %46 = arith.mulf %41, %43 : vector<8x32xf32>
    %47 = arith.addf %45, %46 : vector<8x32xf32>
    %48 = math.tanh %47 : vector<8x32xf32>
    %49 = arith.mulf %44, %48 : vector<8x32xf32>
    %50 = vector.extract_strided_slice %5 {offsets = [8, 0], sizes = [8, 128], strides = [1, 1]} : vector<64x128xf32> to vector<8x128xf32>
    %cst_19 = arith.constant dense<0.000000e+00> : vector<8x128xf32>
    %51 = tpu.matmul %49, %8, %cst_19 {dimension_numbers = #tpu.dot_dimension_numbers<[1], [0], [0], [1], [0, 0, 1, 1], [], []>} : vector<8x32xf32>, vector<32x128xf32>, vector<8x128xf32> -> vector<8x128xf32>
    %52 = arith.addf %51, %11 : vector<8x128xf32>
    %cst_20 = arith.constant dense<0.000000e+00> : vector<8x128xf32>
    %53 = tpu.matmul %32, %6, %cst_20 {dimension_numbers = #tpu.dot_dimension_numbers<[1], [0], [0], [1], [0, 0, 1, 1], [], []>} : vector<8x32xf32>, vector<32x128xf32>, vector<8x128xf32> -> vector<8x128xf32>
    %54 = arith.addf %50, %53 : vector<8x128xf32>
    %55 = arith.negf %54 : vector<8x128xf32>
    %56 = math.exp %55 : vector<8x128xf32>
    %cst_21 = arith.constant 1.000000e+00 : f32
    %57 = vector.broadcast %cst_21 : f32 to vector<8x128xf32>
    %58 = arith.addf %57, %56 : vector<8x128xf32>
    %59 = arith.divf %57, %58 : vector<8x128xf32>
    %60 = math.tanh %54 : vector<8x128xf32>
    %61 = vector.extract_strided_slice %59 {offsets = [0, 0], sizes = [8, 32], strides = [1, 1]} : vector<8x128xf32> to vector<8x32xf32>
    %62 = vector.extract_strided_slice %59 {offsets = [0, 32], sizes = [8, 32], strides = [1, 1]} : vector<8x128xf32> to vector<8x32xf32>
    %63 = vector.extract_strided_slice %60 {offsets = [0, 64], sizes = [8, 32], strides = [1, 1]} : vector<8x128xf32> to vector<8x32xf32>
    %64 = vector.extract_strided_slice %59 {offsets = [0, 96], sizes = [8, 32], strides = [1, 1]} : vector<8x128xf32> to vector<8x32xf32>
    %65 = arith.mulf %62, %30 : vector<8x32xf32>
    %66 = arith.mulf %61, %63 : vector<8x32xf32>
    %67 = arith.addf %65, %66 : vector<8x32xf32>
    %68 = math.tanh %67 : vector<8x32xf32>
    %69 = arith.mulf %64, %68 : vector<8x32xf32>
    %cst_22 = arith.constant dense<0.000000e+00> : vector<8x128xf32>
    %70 = tpu.matmul %69, %7, %cst_22 {dimension_numbers = #tpu.dot_dimension_numbers<[1], [0], [0], [1], [0, 0, 1, 1], [], []>} : vector<8x32xf32>, vector<32x128xf32>, vector<8x128xf32> -> vector<8x128xf32>
    %71 = arith.addf %70, %52 : vector<8x128xf32>
    %72 = arith.negf %71 : vector<8x128xf32>
    %73 = math.exp %72 : vector<8x128xf32>
    %cst_23 = arith.constant 1.000000e+00 : f32
    %74 = vector.broadcast %cst_23 : f32 to vector<8x128xf32>
    %75 = arith.addf %74, %73 : vector<8x128xf32>
    %76 = arith.divf %74, %75 : vector<8x128xf32>
    %77 = math.tanh %71 : vector<8x128xf32>
    %78 = vector.extract_strided_slice %76 {offsets = [0, 0], sizes = [8, 32], strides = [1, 1]} : vector<8x128xf32> to vector<8x32xf32>
    %79 = vector.extract_strided_slice %76 {offsets = [0, 32], sizes = [8, 32], strides = [1, 1]} : vector<8x128xf32> to vector<8x32xf32>
    %80 = vector.extract_strided_slice %77 {offsets = [0, 64], sizes = [8, 32], strides = [1, 1]} : vector<8x128xf32> to vector<8x32xf32>
    %81 = vector.extract_strided_slice %76 {offsets = [0, 96], sizes = [8, 32], strides = [1, 1]} : vector<8x128xf32> to vector<8x32xf32>
    %82 = arith.mulf %79, %47 : vector<8x32xf32>
    %83 = arith.mulf %78, %80 : vector<8x32xf32>
    %84 = arith.addf %82, %83 : vector<8x32xf32>
    %85 = math.tanh %84 : vector<8x32xf32>
    %86 = arith.mulf %81, %85 : vector<8x32xf32>
    %87 = vector.extract_strided_slice %5 {offsets = [16, 0], sizes = [8, 128], strides = [1, 1]} : vector<64x128xf32> to vector<8x128xf32>
    %cst_24 = arith.constant dense<0.000000e+00> : vector<8x128xf32>
    %88 = tpu.matmul %86, %8, %cst_24 {dimension_numbers = #tpu.dot_dimension_numbers<[1], [0], [0], [1], [0, 0, 1, 1], [], []>} : vector<8x32xf32>, vector<32x128xf32>, vector<8x128xf32> -> vector<8x128xf32>
    %89 = arith.addf %88, %11 : vector<8x128xf32>
    %cst_25 = arith.constant dense<0.000000e+00> : vector<8x128xf32>
    %90 = tpu.matmul %69, %6, %cst_25 {dimension_numbers = #tpu.dot_dimension_numbers<[1], [0], [0], [1], [0, 0, 1, 1], [], []>} : vector<8x32xf32>, vector<32x128xf32>, vector<8x128xf32> -> vector<8x128xf32>
    %91 = arith.addf %87, %90 : vector<8x128xf32>
    %92 = arith.negf %91 : vector<8x128xf32>
    %93 = math.exp %92 : vector<8x128xf32>
    %cst_26 = arith.constant 1.000000e+00 : f32
    %94 = vector.broadcast %cst_26 : f32 to vector<8x128xf32>
    %95 = arith.addf %94, %93 : vector<8x128xf32>
    %96 = arith.divf %94, %95 : vector<8x128xf32>
    %97 = math.tanh %91 : vector<8x128xf32>
    %98 = vector.extract_strided_slice %96 {offsets = [0, 0], sizes = [8, 32], strides = [1, 1]} : vector<8x128xf32> to vector<8x32xf32>
    %99 = vector.extract_strided_slice %96 {offsets = [0, 32], sizes = [8, 32], strides = [1, 1]} : vector<8x128xf32> to vector<8x32xf32>
    %100 = vector.extract_strided_slice %97 {offsets = [0, 64], sizes = [8, 32], strides = [1, 1]} : vector<8x128xf32> to vector<8x32xf32>
    %101 = vector.extract_strided_slice %96 {offsets = [0, 96], sizes = [8, 32], strides = [1, 1]} : vector<8x128xf32> to vector<8x32xf32>
    %102 = arith.mulf %99, %67 : vector<8x32xf32>
    %103 = arith.mulf %98, %100 : vector<8x32xf32>
    %104 = arith.addf %102, %103 : vector<8x32xf32>
    %105 = math.tanh %104 : vector<8x32xf32>
    %106 = arith.mulf %101, %105 : vector<8x32xf32>
    %cst_27 = arith.constant dense<0.000000e+00> : vector<8x128xf32>
    %107 = tpu.matmul %106, %7, %cst_27 {dimension_numbers = #tpu.dot_dimension_numbers<[1], [0], [0], [1], [0, 0, 1, 1], [], []>} : vector<8x32xf32>, vector<32x128xf32>, vector<8x128xf32> -> vector<8x128xf32>
    %108 = arith.addf %107, %89 : vector<8x128xf32>
    %109 = arith.negf %108 : vector<8x128xf32>
    %110 = math.exp %109 : vector<8x128xf32>
    %cst_28 = arith.constant 1.000000e+00 : f32
    %111 = vector.broadcast %cst_28 : f32 to vector<8x128xf32>
    %112 = arith.addf %111, %110 : vector<8x128xf32>
    %113 = arith.divf %111, %112 : vector<8x128xf32>
    %114 = math.tanh %108 : vector<8x128xf32>
    %115 = vector.extract_strided_slice %113 {offsets = [0, 0], sizes = [8, 32], strides = [1, 1]} : vector<8x128xf32> to vector<8x32xf32>
    %116 = vector.extract_strided_slice %113 {offsets = [0, 32], sizes = [8, 32], strides = [1, 1]} : vector<8x128xf32> to vector<8x32xf32>
    %117 = vector.extract_strided_slice %114 {offsets = [0, 64], sizes = [8, 32], strides = [1, 1]} : vector<8x128xf32> to vector<8x32xf32>
    %118 = vector.extract_strided_slice %113 {offsets = [0, 96], sizes = [8, 32], strides = [1, 1]} : vector<8x128xf32> to vector<8x32xf32>
    %119 = arith.mulf %116, %84 : vector<8x32xf32>
    %120 = arith.mulf %115, %117 : vector<8x32xf32>
    %121 = arith.addf %119, %120 : vector<8x32xf32>
    %122 = math.tanh %121 : vector<8x32xf32>
    %123 = arith.mulf %118, %122 : vector<8x32xf32>
    %124 = vector.extract_strided_slice %5 {offsets = [24, 0], sizes = [8, 128], strides = [1, 1]} : vector<64x128xf32> to vector<8x128xf32>
    %cst_29 = arith.constant dense<0.000000e+00> : vector<8x128xf32>
    %125 = tpu.matmul %123, %8, %cst_29 {dimension_numbers = #tpu.dot_dimension_numbers<[1], [0], [0], [1], [0, 0, 1, 1], [], []>} : vector<8x32xf32>, vector<32x128xf32>, vector<8x128xf32> -> vector<8x128xf32>
    %126 = arith.addf %125, %11 : vector<8x128xf32>
    %cst_30 = arith.constant dense<0.000000e+00> : vector<8x128xf32>
    %127 = tpu.matmul %106, %6, %cst_30 {dimension_numbers = #tpu.dot_dimension_numbers<[1], [0], [0], [1], [0, 0, 1, 1], [], []>} : vector<8x32xf32>, vector<32x128xf32>, vector<8x128xf32> -> vector<8x128xf32>
    %128 = arith.addf %124, %127 : vector<8x128xf32>
    %129 = arith.negf %128 : vector<8x128xf32>
    %130 = math.exp %129 : vector<8x128xf32>
    %cst_31 = arith.constant 1.000000e+00 : f32
    %131 = vector.broadcast %cst_31 : f32 to vector<8x128xf32>
    %132 = arith.addf %131, %130 : vector<8x128xf32>
    %133 = arith.divf %131, %132 : vector<8x128xf32>
    %134 = math.tanh %128 : vector<8x128xf32>
    %135 = vector.extract_strided_slice %133 {offsets = [0, 0], sizes = [8, 32], strides = [1, 1]} : vector<8x128xf32> to vector<8x32xf32>
    %136 = vector.extract_strided_slice %133 {offsets = [0, 32], sizes = [8, 32], strides = [1, 1]} : vector<8x128xf32> to vector<8x32xf32>
    %137 = vector.extract_strided_slice %134 {offsets = [0, 64], sizes = [8, 32], strides = [1, 1]} : vector<8x128xf32> to vector<8x32xf32>
    %138 = vector.extract_strided_slice %133 {offsets = [0, 96], sizes = [8, 32], strides = [1, 1]} : vector<8x128xf32> to vector<8x32xf32>
    %139 = arith.mulf %136, %104 : vector<8x32xf32>
    %140 = arith.mulf %135, %137 : vector<8x32xf32>
    %141 = arith.addf %139, %140 : vector<8x32xf32>
    %142 = math.tanh %141 : vector<8x32xf32>
    %143 = arith.mulf %138, %142 : vector<8x32xf32>
    %cst_32 = arith.constant dense<0.000000e+00> : vector<8x128xf32>
    %144 = tpu.matmul %143, %7, %cst_32 {dimension_numbers = #tpu.dot_dimension_numbers<[1], [0], [0], [1], [0, 0, 1, 1], [], []>} : vector<8x32xf32>, vector<32x128xf32>, vector<8x128xf32> -> vector<8x128xf32>
    %145 = arith.addf %144, %126 : vector<8x128xf32>
    %146 = arith.negf %145 : vector<8x128xf32>
    %147 = math.exp %146 : vector<8x128xf32>
    %cst_33 = arith.constant 1.000000e+00 : f32
    %148 = vector.broadcast %cst_33 : f32 to vector<8x128xf32>
    %149 = arith.addf %148, %147 : vector<8x128xf32>
    %150 = arith.divf %148, %149 : vector<8x128xf32>
    %151 = math.tanh %145 : vector<8x128xf32>
    %152 = vector.extract_strided_slice %150 {offsets = [0, 0], sizes = [8, 32], strides = [1, 1]} : vector<8x128xf32> to vector<8x32xf32>
    %153 = vector.extract_strided_slice %150 {offsets = [0, 32], sizes = [8, 32], strides = [1, 1]} : vector<8x128xf32> to vector<8x32xf32>
    %154 = vector.extract_strided_slice %151 {offsets = [0, 64], sizes = [8, 32], strides = [1, 1]} : vector<8x128xf32> to vector<8x32xf32>
    %155 = vector.extract_strided_slice %150 {offsets = [0, 96], sizes = [8, 32], strides = [1, 1]} : vector<8x128xf32> to vector<8x32xf32>
    %156 = arith.mulf %153, %121 : vector<8x32xf32>
    %157 = arith.mulf %152, %154 : vector<8x32xf32>
    %158 = arith.addf %156, %157 : vector<8x32xf32>
    %159 = math.tanh %158 : vector<8x32xf32>
    %160 = arith.mulf %155, %159 : vector<8x32xf32>
    %161 = vector.extract_strided_slice %5 {offsets = [32, 0], sizes = [8, 128], strides = [1, 1]} : vector<64x128xf32> to vector<8x128xf32>
    %cst_34 = arith.constant dense<0.000000e+00> : vector<8x128xf32>
    %162 = tpu.matmul %160, %8, %cst_34 {dimension_numbers = #tpu.dot_dimension_numbers<[1], [0], [0], [1], [0, 0, 1, 1], [], []>} : vector<8x32xf32>, vector<32x128xf32>, vector<8x128xf32> -> vector<8x128xf32>
    %163 = arith.addf %162, %11 : vector<8x128xf32>
    %cst_35 = arith.constant dense<0.000000e+00> : vector<8x128xf32>
    %164 = tpu.matmul %143, %6, %cst_35 {dimension_numbers = #tpu.dot_dimension_numbers<[1], [0], [0], [1], [0, 0, 1, 1], [], []>} : vector<8x32xf32>, vector<32x128xf32>, vector<8x128xf32> -> vector<8x128xf32>
    %165 = arith.addf %161, %164 : vector<8x128xf32>
    %166 = arith.negf %165 : vector<8x128xf32>
    %167 = math.exp %166 : vector<8x128xf32>
    %cst_36 = arith.constant 1.000000e+00 : f32
    %168 = vector.broadcast %cst_36 : f32 to vector<8x128xf32>
    %169 = arith.addf %168, %167 : vector<8x128xf32>
    %170 = arith.divf %168, %169 : vector<8x128xf32>
    %171 = math.tanh %165 : vector<8x128xf32>
    %172 = vector.extract_strided_slice %170 {offsets = [0, 0], sizes = [8, 32], strides = [1, 1]} : vector<8x128xf32> to vector<8x32xf32>
    %173 = vector.extract_strided_slice %170 {offsets = [0, 32], sizes = [8, 32], strides = [1, 1]} : vector<8x128xf32> to vector<8x32xf32>
    %174 = vector.extract_strided_slice %171 {offsets = [0, 64], sizes = [8, 32], strides = [1, 1]} : vector<8x128xf32> to vector<8x32xf32>
    %175 = vector.extract_strided_slice %170 {offsets = [0, 96], sizes = [8, 32], strides = [1, 1]} : vector<8x128xf32> to vector<8x32xf32>
    %176 = arith.mulf %173, %141 : vector<8x32xf32>
    %177 = arith.mulf %172, %174 : vector<8x32xf32>
    %178 = arith.addf %176, %177 : vector<8x32xf32>
    %179 = math.tanh %178 : vector<8x32xf32>
    %180 = arith.mulf %175, %179 : vector<8x32xf32>
    %cst_37 = arith.constant dense<0.000000e+00> : vector<8x128xf32>
    %181 = tpu.matmul %180, %7, %cst_37 {dimension_numbers = #tpu.dot_dimension_numbers<[1], [0], [0], [1], [0, 0, 1, 1], [], []>} : vector<8x32xf32>, vector<32x128xf32>, vector<8x128xf32> -> vector<8x128xf32>
    %182 = arith.addf %181, %163 : vector<8x128xf32>
    %183 = arith.negf %182 : vector<8x128xf32>
    %184 = math.exp %183 : vector<8x128xf32>
    %cst_38 = arith.constant 1.000000e+00 : f32
    %185 = vector.broadcast %cst_38 : f32 to vector<8x128xf32>
    %186 = arith.addf %185, %184 : vector<8x128xf32>
    %187 = arith.divf %185, %186 : vector<8x128xf32>
    %188 = math.tanh %182 : vector<8x128xf32>
    %189 = vector.extract_strided_slice %187 {offsets = [0, 0], sizes = [8, 32], strides = [1, 1]} : vector<8x128xf32> to vector<8x32xf32>
    %190 = vector.extract_strided_slice %187 {offsets = [0, 32], sizes = [8, 32], strides = [1, 1]} : vector<8x128xf32> to vector<8x32xf32>
    %191 = vector.extract_strided_slice %188 {offsets = [0, 64], sizes = [8, 32], strides = [1, 1]} : vector<8x128xf32> to vector<8x32xf32>
    %192 = vector.extract_strided_slice %187 {offsets = [0, 96], sizes = [8, 32], strides = [1, 1]} : vector<8x128xf32> to vector<8x32xf32>
    %193 = arith.mulf %190, %158 : vector<8x32xf32>
    %194 = arith.mulf %189, %191 : vector<8x32xf32>
    %195 = arith.addf %193, %194 : vector<8x32xf32>
    %196 = math.tanh %195 : vector<8x32xf32>
    %197 = arith.mulf %192, %196 : vector<8x32xf32>
    %198 = vector.extract_strided_slice %5 {offsets = [40, 0], sizes = [8, 128], strides = [1, 1]} : vector<64x128xf32> to vector<8x128xf32>
    %cst_39 = arith.constant dense<0.000000e+00> : vector<8x128xf32>
    %199 = tpu.matmul %197, %8, %cst_39 {dimension_numbers = #tpu.dot_dimension_numbers<[1], [0], [0], [1], [0, 0, 1, 1], [], []>} : vector<8x32xf32>, vector<32x128xf32>, vector<8x128xf32> -> vector<8x128xf32>
    %200 = arith.addf %199, %11 : vector<8x128xf32>
    %cst_40 = arith.constant dense<0.000000e+00> : vector<8x128xf32>
    %201 = tpu.matmul %180, %6, %cst_40 {dimension_numbers = #tpu.dot_dimension_numbers<[1], [0], [0], [1], [0, 0, 1, 1], [], []>} : vector<8x32xf32>, vector<32x128xf32>, vector<8x128xf32> -> vector<8x128xf32>
    %202 = arith.addf %198, %201 : vector<8x128xf32>
    %203 = arith.negf %202 : vector<8x128xf32>
    %204 = math.exp %203 : vector<8x128xf32>
    %cst_41 = arith.constant 1.000000e+00 : f32
    %205 = vector.broadcast %cst_41 : f32 to vector<8x128xf32>
    %206 = arith.addf %205, %204 : vector<8x128xf32>
    %207 = arith.divf %205, %206 : vector<8x128xf32>
    %208 = math.tanh %202 : vector<8x128xf32>
    %209 = vector.extract_strided_slice %207 {offsets = [0, 0], sizes = [8, 32], strides = [1, 1]} : vector<8x128xf32> to vector<8x32xf32>
    %210 = vector.extract_strided_slice %207 {offsets = [0, 32], sizes = [8, 32], strides = [1, 1]} : vector<8x128xf32> to vector<8x32xf32>
    %211 = vector.extract_strided_slice %208 {offsets = [0, 64], sizes = [8, 32], strides = [1, 1]} : vector<8x128xf32> to vector<8x32xf32>
    %212 = vector.extract_strided_slice %207 {offsets = [0, 96], sizes = [8, 32], strides = [1, 1]} : vector<8x128xf32> to vector<8x32xf32>
    %213 = arith.mulf %210, %178 : vector<8x32xf32>
    %214 = arith.mulf %209, %211 : vector<8x32xf32>
    %215 = arith.addf %213, %214 : vector<8x32xf32>
    %216 = math.tanh %215 : vector<8x32xf32>
    %217 = arith.mulf %212, %216 : vector<8x32xf32>
    %cst_42 = arith.constant dense<0.000000e+00> : vector<8x128xf32>
    %218 = tpu.matmul %217, %7, %cst_42 {dimension_numbers = #tpu.dot_dimension_numbers<[1], [0], [0], [1], [0, 0, 1, 1], [], []>} : vector<8x32xf32>, vector<32x128xf32>, vector<8x128xf32> -> vector<8x128xf32>
    %219 = arith.addf %218, %200 : vector<8x128xf32>
    %220 = arith.negf %219 : vector<8x128xf32>
    %221 = math.exp %220 : vector<8x128xf32>
    %cst_43 = arith.constant 1.000000e+00 : f32
    %222 = vector.broadcast %cst_43 : f32 to vector<8x128xf32>
    %223 = arith.addf %222, %221 : vector<8x128xf32>
    %224 = arith.divf %222, %223 : vector<8x128xf32>
    %225 = math.tanh %219 : vector<8x128xf32>
    %226 = vector.extract_strided_slice %224 {offsets = [0, 0], sizes = [8, 32], strides = [1, 1]} : vector<8x128xf32> to vector<8x32xf32>
    %227 = vector.extract_strided_slice %224 {offsets = [0, 32], sizes = [8, 32], strides = [1, 1]} : vector<8x128xf32> to vector<8x32xf32>
    %228 = vector.extract_strided_slice %225 {offsets = [0, 64], sizes = [8, 32], strides = [1, 1]} : vector<8x128xf32> to vector<8x32xf32>
    %229 = vector.extract_strided_slice %224 {offsets = [0, 96], sizes = [8, 32], strides = [1, 1]} : vector<8x128xf32> to vector<8x32xf32>
    %230 = arith.mulf %227, %195 : vector<8x32xf32>
    %231 = arith.mulf %226, %228 : vector<8x32xf32>
    %232 = arith.addf %230, %231 : vector<8x32xf32>
    %233 = math.tanh %232 : vector<8x32xf32>
    %234 = arith.mulf %229, %233 : vector<8x32xf32>
    %235 = vector.extract_strided_slice %5 {offsets = [48, 0], sizes = [8, 128], strides = [1, 1]} : vector<64x128xf32> to vector<8x128xf32>
    %cst_44 = arith.constant dense<0.000000e+00> : vector<8x128xf32>
    %236 = tpu.matmul %234, %8, %cst_44 {dimension_numbers = #tpu.dot_dimension_numbers<[1], [0], [0], [1], [0, 0, 1, 1], [], []>} : vector<8x32xf32>, vector<32x128xf32>, vector<8x128xf32> -> vector<8x128xf32>
    %237 = arith.addf %236, %11 : vector<8x128xf32>
    %cst_45 = arith.constant dense<0.000000e+00> : vector<8x128xf32>
    %238 = tpu.matmul %217, %6, %cst_45 {dimension_numbers = #tpu.dot_dimension_numbers<[1], [0], [0], [1], [0, 0, 1, 1], [], []>} : vector<8x32xf32>, vector<32x128xf32>, vector<8x128xf32> -> vector<8x128xf32>
    %239 = arith.addf %235, %238 : vector<8x128xf32>
    %240 = arith.negf %239 : vector<8x128xf32>
    %241 = math.exp %240 : vector<8x128xf32>
    %cst_46 = arith.constant 1.000000e+00 : f32
    %242 = vector.broadcast %cst_46 : f32 to vector<8x128xf32>
    %243 = arith.addf %242, %241 : vector<8x128xf32>
    %244 = arith.divf %242, %243 : vector<8x128xf32>
    %245 = math.tanh %239 : vector<8x128xf32>
    %246 = vector.extract_strided_slice %244 {offsets = [0, 0], sizes = [8, 32], strides = [1, 1]} : vector<8x128xf32> to vector<8x32xf32>
    %247 = vector.extract_strided_slice %244 {offsets = [0, 32], sizes = [8, 32], strides = [1, 1]} : vector<8x128xf32> to vector<8x32xf32>
    %248 = vector.extract_strided_slice %245 {offsets = [0, 64], sizes = [8, 32], strides = [1, 1]} : vector<8x128xf32> to vector<8x32xf32>
    %249 = vector.extract_strided_slice %244 {offsets = [0, 96], sizes = [8, 32], strides = [1, 1]} : vector<8x128xf32> to vector<8x32xf32>
    %250 = arith.mulf %247, %215 : vector<8x32xf32>
    %251 = arith.mulf %246, %248 : vector<8x32xf32>
    %252 = arith.addf %250, %251 : vector<8x32xf32>
    %253 = math.tanh %252 : vector<8x32xf32>
    %254 = arith.mulf %249, %253 : vector<8x32xf32>
    %cst_47 = arith.constant dense<0.000000e+00> : vector<8x128xf32>
    %255 = tpu.matmul %254, %7, %cst_47 {dimension_numbers = #tpu.dot_dimension_numbers<[1], [0], [0], [1], [0, 0, 1, 1], [], []>} : vector<8x32xf32>, vector<32x128xf32>, vector<8x128xf32> -> vector<8x128xf32>
    %256 = arith.addf %255, %237 : vector<8x128xf32>
    %257 = arith.negf %256 : vector<8x128xf32>
    %258 = math.exp %257 : vector<8x128xf32>
    %cst_48 = arith.constant 1.000000e+00 : f32
    %259 = vector.broadcast %cst_48 : f32 to vector<8x128xf32>
    %260 = arith.addf %259, %258 : vector<8x128xf32>
    %261 = arith.divf %259, %260 : vector<8x128xf32>
    %262 = math.tanh %256 : vector<8x128xf32>
    %263 = vector.extract_strided_slice %261 {offsets = [0, 0], sizes = [8, 32], strides = [1, 1]} : vector<8x128xf32> to vector<8x32xf32>
    %264 = vector.extract_strided_slice %261 {offsets = [0, 32], sizes = [8, 32], strides = [1, 1]} : vector<8x128xf32> to vector<8x32xf32>
    %265 = vector.extract_strided_slice %262 {offsets = [0, 64], sizes = [8, 32], strides = [1, 1]} : vector<8x128xf32> to vector<8x32xf32>
    %266 = vector.extract_strided_slice %261 {offsets = [0, 96], sizes = [8, 32], strides = [1, 1]} : vector<8x128xf32> to vector<8x32xf32>
    %267 = arith.mulf %264, %232 : vector<8x32xf32>
    %268 = arith.mulf %263, %265 : vector<8x32xf32>
    %269 = arith.addf %267, %268 : vector<8x32xf32>
    %270 = math.tanh %269 : vector<8x32xf32>
    %271 = arith.mulf %266, %270 : vector<8x32xf32>
    %272 = vector.extract_strided_slice %5 {offsets = [56, 0], sizes = [8, 128], strides = [1, 1]} : vector<64x128xf32> to vector<8x128xf32>
    %cst_49 = arith.constant dense<0.000000e+00> : vector<8x128xf32>
    %273 = tpu.matmul %271, %8, %cst_49 {dimension_numbers = #tpu.dot_dimension_numbers<[1], [0], [0], [1], [0, 0, 1, 1], [], []>} : vector<8x32xf32>, vector<32x128xf32>, vector<8x128xf32> -> vector<8x128xf32>
    %274 = arith.addf %273, %11 : vector<8x128xf32>
    %cst_50 = arith.constant dense<0.000000e+00> : vector<8x128xf32>
    %275 = tpu.matmul %254, %6, %cst_50 {dimension_numbers = #tpu.dot_dimension_numbers<[1], [0], [0], [1], [0, 0, 1, 1], [], []>} : vector<8x32xf32>, vector<32x128xf32>, vector<8x128xf32> -> vector<8x128xf32>
    %276 = arith.addf %272, %275 : vector<8x128xf32>
    %277 = arith.negf %276 : vector<8x128xf32>
    %278 = math.exp %277 : vector<8x128xf32>
    %cst_51 = arith.constant 1.000000e+00 : f32
    %279 = vector.broadcast %cst_51 : f32 to vector<8x128xf32>
    %280 = arith.addf %279, %278 : vector<8x128xf32>
    %281 = arith.divf %279, %280 : vector<8x128xf32>
    %282 = math.tanh %276 : vector<8x128xf32>
    %283 = vector.extract_strided_slice %281 {offsets = [0, 0], sizes = [8, 32], strides = [1, 1]} : vector<8x128xf32> to vector<8x32xf32>
    %284 = vector.extract_strided_slice %281 {offsets = [0, 32], sizes = [8, 32], strides = [1, 1]} : vector<8x128xf32> to vector<8x32xf32>
    %285 = vector.extract_strided_slice %282 {offsets = [0, 64], sizes = [8, 32], strides = [1, 1]} : vector<8x128xf32> to vector<8x32xf32>
    %286 = vector.extract_strided_slice %281 {offsets = [0, 96], sizes = [8, 32], strides = [1, 1]} : vector<8x128xf32> to vector<8x32xf32>
    %287 = arith.mulf %284, %252 : vector<8x32xf32>
    %288 = arith.mulf %283, %285 : vector<8x32xf32>
    %289 = arith.addf %287, %288 : vector<8x32xf32>
    %290 = math.tanh %289 : vector<8x32xf32>
    %291 = arith.mulf %286, %290 : vector<8x32xf32>
    %cst_52 = arith.constant dense<0.000000e+00> : vector<8x128xf32>
    %292 = tpu.matmul %291, %7, %cst_52 {dimension_numbers = #tpu.dot_dimension_numbers<[1], [0], [0], [1], [0, 0, 1, 1], [], []>} : vector<8x32xf32>, vector<32x128xf32>, vector<8x128xf32> -> vector<8x128xf32>
    %293 = arith.addf %292, %274 : vector<8x128xf32>
    %294 = arith.negf %293 : vector<8x128xf32>
    %295 = math.exp %294 : vector<8x128xf32>
    %cst_53 = arith.constant 1.000000e+00 : f32
    %296 = vector.broadcast %cst_53 : f32 to vector<8x128xf32>
    %297 = arith.addf %296, %295 : vector<8x128xf32>
    %298 = arith.divf %296, %297 : vector<8x128xf32>
    %299 = math.tanh %293 : vector<8x128xf32>
    %300 = vector.extract_strided_slice %298 {offsets = [0, 0], sizes = [8, 32], strides = [1, 1]} : vector<8x128xf32> to vector<8x32xf32>
    %301 = vector.extract_strided_slice %298 {offsets = [0, 32], sizes = [8, 32], strides = [1, 1]} : vector<8x128xf32> to vector<8x32xf32>
    %302 = vector.extract_strided_slice %299 {offsets = [0, 64], sizes = [8, 32], strides = [1, 1]} : vector<8x128xf32> to vector<8x32xf32>
    %303 = vector.extract_strided_slice %298 {offsets = [0, 96], sizes = [8, 32], strides = [1, 1]} : vector<8x128xf32> to vector<8x32xf32>
    %304 = arith.mulf %301, %269 : vector<8x32xf32>
    %305 = arith.mulf %300, %302 : vector<8x32xf32>
    %306 = arith.addf %304, %305 : vector<8x32xf32>
    %307 = math.tanh %306 : vector<8x32xf32>
    %308 = arith.mulf %303, %307 : vector<8x32xf32>
    %c0_54 = arith.constant 0 : index
    %c0_55 = arith.constant 0 : index
    %309 = vector.load %arg7[%c0_54, %c0_55] : memref<32x128xf32, #tpu.memory_space<vmem>>, vector<32x128xf32>
    %cst_56 = arith.constant dense<0.000000e+00> : vector<8x128xf32>
    %310 = tpu.matmul %308, %309, %cst_56 {dimension_numbers = #tpu.dot_dimension_numbers<[1], [0], [0], [1], [0, 0, 1, 1], [], []>} : vector<8x32xf32>, vector<32x128xf32>, vector<8x128xf32> -> vector<8x128xf32>
    %c0_57 = arith.constant 0 : index
    %c0_58 = arith.constant 0 : index
    %311 = vector.load %arg8[%c0_57, %c0_58] : memref<1x128xf32, #tpu.memory_space<vmem>>, vector<1x128xf32>
    %312 = vector.broadcast %311 : vector<1x128xf32> to vector<8x128xf32>
    %313 = arith.addf %310, %312 : vector<8x128xf32>
    %c0_59 = arith.constant 0 : index
    %c0_60 = arith.constant 0 : index
    %314 = vector.load %arg9[%c0_59, %c0_60] : memref<8x128xf32, #tpu.memory_space<vmem>>, vector<8x128xf32>
    tpu.vector_store %arg9[%c0_59, %c0_60], %313 {strides = array<i32>} : memref<8x128xf32, #tpu.memory_space<vmem>>, vector<8x128xf32>,
    return
  }
}

</mosaic_0001>

<llo_original>
// kernel: encoder_forward.1
$region0: #{encoder_forward.1}
  #allocation0 [shape = 'u32[]', space=smem, size = 0x4, offset = 0x4, fixed_abs, tag = 'smem constant byte address 0x4 - core index']
  #allocation1 [shape = 'u32[72,128]{1,0:T(1,128)}', space=vmem, size = 0x9000, scoped, tag = 'internal scratch']
  %s0 = inlined_call_operand.vmem [shape: f32[64,64], index: 0, kind: input, shape index: {}]
  %s1 = inlined_call_operand.vmem [shape: f32[64,128], index: 1, kind: input, shape index: {}]
  %s2 = inlined_call_operand.hbm [shape: f32[1,128], index: 2, kind: input, shape index: {}]
  %s3 = inlined_call_operand.vmem [shape: f32[32,128], index: 3, kind: input, shape index: {}]
  %s4 = inlined_call_operand.vmem [shape: f32[32,128], index: 4, kind: input, shape index: {}]
  %s5 = inlined_call_operand.hbm [shape: f32[32,128], index: 5, kind: input, shape index: {}]
  %s6 = inlined_call_operand.vmem [shape: f32[1,128], index: 6, kind: input, shape index: {}]
  %s7 = inlined_call_operand.hbm [shape: f32[32,128], index: 7, kind: input, shape index: {}]
  %s8 = inlined_call_operand.hbm [shape: f32[1,128], index: 8, kind: input, shape index: {}]
  %s9 = inlined_call_operand.vmem [shape: f32[8,128], index: 9, kind: output, shape index: {}]
  %s10 = sld [smem:[#allocation0]]
  $region62: #{encoder_forward.1} parent=0
    _
  %s12 = ssub.s32 1, %s10
  %s13 = scalar_select 0, %s12, %s10
  $region1: #{encoder_forward.1} parent=0
    #allocation2 [shape = 'u8[512]{0}', space=vmem, size = 0x400, scoped, tag = 'input window, operand 2, single buffered']
    #allocation3 [shape = 's32[1]{0}', space=sflag, size = 0x4, scoped, tag = 'scoped memory for encoder_forward.1']
    #allocation4 [shape = 'u8[16384]{0}', space=vmem, size = 0x4000, scoped, tag = 'input window, operand 5, single buffered']
    #allocation5 [shape = 's32[1]{0}', space=sflag, size = 0x4, scoped, tag = 'scoped memory for encoder_forward.1']
    #allocation6 [shape = 'u8[16384]{0}', space=vmem, size = 0x4000, scoped, tag = 'input window, operand 7, single buffered']
    #allocation7 [shape = 'u8[512]{0}', space=vmem, size = 0x400, scoped, tag = 'input window, operand 8, single buffered']
    #allocation8 [shape = 's32[1]{0}', space=sflag, size = 0x4, scoped, tag = 'scoped memory for encoder_forward.1']
    %14 = vsyncpa [#allocation3], 0
    %15 = vsyncpa [#allocation5], 0
    %16 = vsyncpa [#allocation8], 0
    // Predicated region
    $region2: #{encoder_forward.1} parent=1 // pred_check
      _
    $region3: #{encoder_forward.1} parent=1 // pred_check_branch
      %18 = sbr.rel (0) target = $region5
    $region4: #{encoder_forward.1} parent=1 // pred_region
      _
    $region5: #{encoder_forward.1} parent=1 // pred_fallthru
      _
    // Predicated region
    $region6: #{encoder_forward.1} parent=1 // pred_check
      _
    $region7: #{encoder_forward.1} parent=1 // pred_check_branch
      %20 = sbr.rel (0) target = $region9
    $region8: #{encoder_forward.1} parent=1 // pred_region
      _
    $region9: #{encoder_forward.1} parent=1 // pred_fallthru
      _
    // Predicated region
    $region10: #{encoder_forward.1} parent=1 // pred_check
      _
    $region11: #{encoder_forward.1} parent=1 // pred_check_branch
      %22 = sbr.rel (0) target = $region13
    $region12: #{encoder_forward.1} parent=1 // pred_region
      %24 = vsyncadd [#allocation3], 0
      %s26 = sshll.u32 %s2, 4
      %s27 = int_to_ptr.hbm [resolvable:$true] %s26
      %s28 = sshll.u32 [#allocation2], 4
      %s29 = int_to_ptr.vmem [resolvable:$true] %s28
      %31 = dma.hbm_to_vmem [thread:$0]  %s27, 16, %s29, [#allocation3]
    $region13: #{encoder_forward.1} parent=1 // pred_fallthru
      _
    // Predicated region
    $region14: #{encoder_forward.1} parent=1 // pred_check
      _
    $region15: #{encoder_forward.1} parent=1 // pred_check_branch
      %33 = sbr.rel (0) target = $region17
    $region16: #{encoder_forward.1} parent=1 // pred_region
      _
    $region17: #{encoder_forward.1} parent=1 // pred_fallthru
      _
    // Predicated region
    $region18: #{encoder_forward.1} parent=1 // pred_check
      _
    $region19: #{encoder_forward.1} parent=1 // pred_check_branch
      %35 = sbr.rel (0) target = $region21
    $region20: #{encoder_forward.1} parent=1 // pred_region
      _
    $region21: #{encoder_forward.1} parent=1 // pred_fallthru
      _
    // Predicated region
    $region22: #{encoder_forward.1} parent=1 // pred_check
      _
    $region23: #{encoder_forward.1} parent=1 // pred_check_branch
      %37 = sbr.rel (0) target = $region25
    $region24: #{encoder_forward.1} parent=1 // pred_region
      %39 = vsyncadd [#allocation5], 0
      %s40 = sshll.u32 %s5, 4
      %s41 = int_to_ptr.hbm [resolvable:$true] %s40
      %s42 = sshll.u32 [#allocation4], 4
      %s43 = int_to_ptr.vmem [resolvable:$true] %s42
      %48 = dma.hbm_to_vmem [thread:$0]  %s41, 512, %s43, [#allocation5], 128, 128, 8
    $region25: #{encoder_forward.1} parent=1 // pred_fallthru
      _
    // Predicated region
    $region26: #{encoder_forward.1} parent=1 // pred_check
      _
    $region27: #{encoder_forward.1} parent=1 // pred_check_branch
      %50 = sbr.rel (0) target = $region29
    $region28: #{encoder_forward.1} parent=1 // pred_region
      _
    $region29: #{encoder_forward.1} parent=1 // pred_fallthru
      _
    // Predicated region
    $region30: #{encoder_forward.1} parent=1 // pred_check
      _
    $region31: #{encoder_forward.1} parent=1 // pred_check_branch
      %52 = sbr.rel (0) target = $region33
    $region32: #{encoder_forward.1} parent=1 // pred_region
      %54 = vsyncadd [#allocation5], 0
      %s55 = sshll.u32 %s7, 4
      %s56 = int_to_ptr.hbm [resolvable:$true] %s55
      %s57 = sshll.u32 [#allocation6], 4
      %s58 = int_to_ptr.vmem [resolvable:$true] %s57
      %63 = dma.hbm_to_vmem [thread:$0]  %s56, 512, %s58, [#allocation5], 128, 128, 8
    $region33: #{encoder_forward.1} parent=1 // pred_fallthru
      _
    // Predicated region
    $region34: #{encoder_forward.1} parent=1 // pred_check
      _
    $region35: #{encoder_forward.1} parent=1 // pred_check_branch
      %65 = sbr.rel (0) target = $region37
    $region36: #{encoder_forward.1} parent=1 // pred_region
      %67 = vsyncadd [#allocation8], 0
      %s69 = sshll.u32 %s8, 4
      %s70 = int_to_ptr.hbm [resolvable:$true] %s69
      %s71 = sshll.u32 [#allocation7], 4
      %s72 = int_to_ptr.vmem [resolvable:$true] %s71
      %74 = dma.hbm_to_vmem [thread:$0]  %s70, 16, %s72, [#allocation8]
    $region37: #{encoder_forward.1} parent=1 // pred_fallthru
      _
    // Predicated region
    $region38: #{encoder_forward.1} parent=1 // pred_check
      _
    $region39: #{encoder_forward.1} parent=1 // pred_check_branch
      %76 = sbr.rel (0) target = $region41
    $region40: #{encoder_forward.1} parent=1 // pred_region
      %78 = dma.done [#allocation3], 16
    $region41: #{encoder_forward.1} parent=1 // pred_fallthru
      _
    // Predicated region
    $region42: #{encoder_forward.1} parent=1 // pred_check
      _
    $region43: #{encoder_forward.1} parent=1 // pred_check_branch
      %80 = sbr.rel (0) target = $region45
    $region44: #{encoder_forward.1} parent=1 // pred_region
      %82 = dma.done [#allocation5], 512
    $region45: #{encoder_forward.1} parent=1 // pred_fallthru
      _
    // Predicated region
    $region46: #{encoder_forward.1} parent=1 // pred_check
      _
    $region47: #{encoder_forward.1} parent=1 // pred_check_branch
      %84 = sbr.rel (0) target = $region49
    $region48: #{encoder_forward.1} parent=1 // pred_region
      %86 = dma.done [#allocation5], 512
    $region49: #{encoder_forward.1} parent=1 // pred_fallthru
      _
    // Predicated region
    $region50: #{encoder_forward.1} parent=1 // pred_check
      _
    $region51: #{encoder_forward.1} parent=1 // pred_check_branch
      %88 = sbr.rel (0) target = $region53
    $region52: #{encoder_forward.1} parent=1 // pred_region
      %90 = dma.done [#allocation8], 16
    $region53: #{encoder_forward.1} parent=1 // pred_fallthru
      _
    %v91 = vld [vmem:[%s0] sm:$0xff]
    %v92 = vld [vmem:[%s0 + $0x8] sm:$0xff]
    %v93 = vld [vmem:[%s0 + $0x10] sm:$0xff]
    %v94 = vld [vmem:[%s0 + $0x18] sm:$0xff]
    %v95 = vld [vmem:[%s0 + $0x20] sm:$0xff]
    %v96 = vld [vmem:[%s0 + $0x28] sm:$0xff]
    %v97 = vld [vmem:[%s0 + $0x30] sm:$0xff]
    %v98 = vld [vmem:[%s0 + $0x38] sm:$0xff]
    %v99 = vld [vmem:[%s1] sm:$0xff]
    %v100 = vld [vmem:[%s1 + $0x8] sm:$0xff]
    %v101 = vld [vmem:[%s1 + $0x10] sm:$0xff]
    %v102 = vld [vmem:[%s1 + $0x18] sm:$0xff]
    %v103 = vld [vmem:[%s1 + $0x20] sm:$0xff]
    %v104 = vld [vmem:[%s1 + $0x28] sm:$0xff]
    %v105 = vld [vmem:[%s1 + $0x30] sm:$0xff]
    %v106 = vld [vmem:[%s1 + $0x38] sm:$0xff]
    %v107 = vld [vmem:[#allocation2] sm:$0x1]
    %v109 = vperm.slane %v107, 0
    %vm111 = vcmask 523264
    %v113 = vsel %vm111, %v91, 0
    %v116 = vsel %vm111, %v92, 0
    %v119 = vsel %vm111, %v93, 0
    %v122 = vsel %vm111, %v94, 0
    %v125 = vsel %vm111, %v95, 0
    %v128 = vsel %vm111, %v96, 0
    %v131 = vsel %vm111, %v97, 0
    %v134 = vsel %vm111, %v98, 0
    %136 = vmatpush.msra.mxu0 0.0
    %137 = vmatpush.msra.mxu0 0.0
    %138 = vmatpush.msra.mxu0 0.0
    %139 = vmatpush.msra.mxu0 0.0
    %140 = vmatpush.msra.mxu0 0.0
    %141 = vmatpush.msra.mxu0 0.0
    %142 = vmatpush.msra.mxu0 0.0
    %143 = vmatpush.msra.mxu0 0.0
    %144 = vmatpush.msra.mxu0 %v106
    %145 = vmatpush.msra.mxu0 %v105
    %146 = vmatpush.msra.mxu0 %v104
    %147 = vmatpush.msra.mxu0 %v103
    %148 = vmatpush.msra.mxu0 %v102
    %149 = vmatpush.msra.mxu0 %v101
    %150 = vmatpush.msra.mxu0 %v100
    %151 = vmatpush.msra.mxu0 %v99
    %152 = vmatmul.f32.gmra.mxu0 %v113
    %v153 = vpop.f32.mrf.mxu0
    %v154 = vadd.f32 %v109, %v153
    %155 = vmatmul.f32.gmra.mxu0 %v116
    %v156 = vpop.f32.mrf.mxu0
    %v157 = vadd.f32 %v109, %v156
    %158 = vmatmul.f32.gmra.mxu0 %v119
    %v159 = vpop.f32.mrf.mxu0
    %v160 = vadd.f32 %v109, %v159
    %161 = vmatmul.f32.gmra.mxu0 %v122
    %v162 = vpop.f32.mrf.mxu0
    %v163 = vadd.f32 %v109, %v162
    %164 = vmatmul.f32.gmra.mxu0 %v125
    %v165 = vpop.f32.mrf.mxu0
    %v166 = vadd.f32 %v109, %v165
    %167 = vmatmul.f32.gmra.mxu0 %v128
    %v168 = vpop.f32.mrf.mxu0
    %v169 = vadd.f32 %v109, %v168
    %170 = vmatmul.f32.gmra.mxu0 %v131
    %v171 = vpop.f32.mrf.mxu0
    %v172 = vadd.f32 %v109, %v171
    %173 = vmatmul.f32.gmra.mxu0 %v134
    %v174 = vpop.f32.mrf.mxu0
    %v175 = vadd.f32 %v109, %v174
    %176 = vdwg.mxu0
    %v177 = vld [vmem:[%s3] sm:$0xff]
    %v178 = vld [vmem:[%s3 + $0x8] sm:$0xff]
    %v179 = vld [vmem:[%s3 + $0x10] sm:$0xff]
    %v180 = vld [vmem:[%s3 + $0x18] sm:$0xff]
    %v181 = vld [vmem:[%s4] sm:$0xff]
    %v182 = vld [vmem:[%s4 + $0x8] sm:$0xff]
    %v183 = vld [vmem:[%s4 + $0x10] sm:$0xff]
    %v184 = vld [vmem:[%s4 + $0x18] sm:$0xff]
    %v185 = vld [vmem:[#allocation4] sm:$0xff]
    %v186 = vld [vmem:[#allocation4 + $0x8] sm:$0xff]
    %v187 = vld [vmem:[#allocation4 + $0x10] sm:$0xff]
    %v188 = vld [vmem:[#allocation4 + $0x18] sm:$0xff]
    %v189 = vld [vmem:[%s6] sm:$0x1]
    %v191 = vperm.slane %v189, 0
    %vm193 = vcmask 261120
    %v195 = vsel %vm193, 0.0, 0
    %197 = vmatpush.msra.mxu0 0.0
    %198 = vmatpush.msra.mxu0 0.0
    %199 = vmatpush.msra.mxu0 0.0
    %200 = vmatpush.msra.mxu0 0.0
    %201 = vmatpush.msra.mxu0 0.0
    %202 = vmatpush.msra.mxu0 0.0
    %203 = vmatpush.msra.mxu0 0.0
    %204 = vmatpush.msra.mxu0 0.0
    %205 = vmatpush.msra.mxu0 0.0
    %206 = vmatpush.msra.mxu0 0.0
    %207 = vmatpush.msra.mxu0 0.0
    %208 = vmatpush.msra.mxu0 0.0
    %209 = vmatpush.msra.mxu0 %v188
    %210 = vmatpush.msra.mxu0 %v187
    %211 = vmatpush.msra.mxu0 %v186
    %212 = vmatpush.msra.mxu0 %v185
    %213 = vmatmul.f32.gmra.mxu0 %v195
    %v214 = vpop.f32.mrf.mxu0
    %v215 = vadd.f32 %v191, %v214
    %216 = vdwg.mxu0
    %217 = vmatpush.msra.mxu0 0.0
    %218 = vmatpush.msra.mxu0 0.0
    %219 = vmatpush.msra.mxu0 0.0
    %220 = vmatpush.msra.mxu0 0.0
    %221 = vmatpush.msra.mxu0 0.0
    %222 = vmatpush.msra.mxu0 0.0
    %223 = vmatpush.msra.mxu0 0.0
    %224 = vmatpush.msra.mxu0 0.0
    %225 = vmatpush.msra.mxu0 0.0
    %226 = vmatpush.msra.mxu0 0.0
    %227 = vmatpush.msra.mxu0 0.0
    %228 = vmatpush.msra.mxu0 0.0
    %229 = vmatpush.msra.mxu0 %v180
    %230 = vmatpush.msra.mxu0 %v179
    %231 = vmatpush.msra.mxu0 %v178
    %232 = vmatpush.msra.mxu0 %v177
    %233 = vmatmul.f32.gmra.mxu0 %v195
    %v234 = vpop.f32.mrf.mxu0
    %v235 = vadd.f32 0.0, %v234
    %236 = vdwg.mxu0
    %v237 = vadd.f32 %v154, %v235
    %v238 = vxor.u32 %v237, 2147483648
    %v239 = vmul.f32 %v238, 1.442695
    %v240 = vpow.pop %v239
    %v241 = vadd.f32 %v240, 1.0
    %v242 = vrcp.pop %v241
    %v243 = vmul.f32 %v241, %v242
    %v244 = vsub.f32 1.0, %v243
    %v245 = vmul.f32 %v242, %v244
    %v246 = vadd.f32 %v242, %v245
    %vm247 = vweird.f32 %v241
    %vm248 = vweird.f32 %v242
    %vm249 = vmor %vm247, %vm248
    %v250 = vsel %vm249, %v242, %v246
    %v251 = vand.u32 2147483647, %v241
    %vm252 = vcmp.eq.f32.partialorder %v251, 8.507059e+37
    %v253 = vand.u32 %v241, 2147483648
    %v254 = vor.u32 1.1754944e-38, %v253
    %v255 = vsel %vm252, %v254, %v250
    %v256 = vmul.f32 1.0, %v255
    %v257 = vtanh.pop %v237
    %v258 = vmul.f32 %v256, 0.0
    %260 = vrot.lane.b32.xlu0 %v257, 64
    %v261 = vpop.permute.xlu0 %260
    %v263 = vmul.f32 %v256, %v261
    %265 = vrot.lane.b32.xlu0 %v263, 32
    %v266 = vpop.permute.xlu0 %265
    %v268 = vadd.f32 %v258, %v266
    %v269 = vtanh.pop %v268
    %271 = vrot.lane.b32.xlu0 %v269, 64
    %v272 = vpop.permute.xlu0 %271
    %v274 = vmul.f32 %v256, %v272
    %276 = vrot.lane.b32.xlu0 %v274, 32
    %v277 = vpop.permute.xlu0 %276
    %v278 = vsel %vm193, %v277, 0
    %280 = vmatpush.msra.mxu0 0.0
    %281 = vmatpush.msra.mxu0 0.0
    %282 = vmatpush.msra.mxu0 0.0
    %283 = vmatpush.msra.mxu0 0.0
    %284 = vmatpush.msra.mxu0 0.0
    %285 = vmatpush.msra.mxu0 0.0
    %286 = vmatpush.msra.mxu0 0.0
    %287 = vmatpush.msra.mxu0 0.0
    %288 = vmatpush.msra.mxu0 0.0
    %289 = vmatpush.msra.mxu0 0.0
    %290 = vmatpush.msra.mxu0 0.0
    %291 = vmatpush.msra.mxu0 0.0
    %292 = vmatpush.msra.mxu0 %v184
    %293 = vmatpush.msra.mxu0 %v183
    %294 = vmatpush.msra.mxu0 %v182
    %295 = vmatpush.msra.mxu0 %v181
    %296 = vmatmul.f32.gmra.mxu0 %v278
    %v297 = vpop.f32.mrf.mxu0
    %v298 = vadd.f32 %v215, %v297
    %299 = vdwg.mxu0
    %v300 = vxor.u32 %v298, 2147483648
    %v301 = vmul.f32 %v300, 1.442695
    %v302 = vpow.pop %v301
    %v303 = vadd.f32 %v302, 1.0
    %v304 = vrcp.pop %v303
    %v305 = vmul.f32 %v303, %v304
    %v306 = vsub.f32 1.0, %v305
    %v307 = vmul.f32 %v304, %v306
    %v308 = vadd.f32 %v304, %v307
    %vm309 = vweird.f32 %v303
    %vm310 = vweird.f32 %v304
    %vm311 = vmor %vm309, %vm310
    %v312 = vsel %vm311, %v304, %v308
    %v313 = vand.u32 2147483647, %v303
    %vm314 = vcmp.eq.f32.partialorder %v313, 8.507059e+37
    %v315 = vand.u32 %v303, 2147483648
    %v316 = vor.u32 1.1754944e-38, %v315
    %v317 = vsel %vm314, %v316, %v312
    %v318 = vmul.f32 1.0, %v317
    %v319 = vtanh.pop %v298
    %v320 = vmul.f32 %v318, 0.0
    %322 = vrot.lane.b32.xlu0 %v319, 64
    %v323 = vpop.permute.xlu0 %322
    %v325 = vmul.f32 %v318, %v323
    %327 = vrot.lane.b32.xlu0 %v325, 32
    %v328 = vpop.permute.xlu0 %327
    %v330 = vadd.f32 %v320, %v328
    %v331 = vtanh.pop %v330
    %333 = vrot.lane.b32.xlu0 %v331, 64
    %v334 = vpop.permute.xlu0 %333
    %v336 = vmul.f32 %v318, %v334
    %338 = vrot.lane.b32.xlu0 %v336, 32
    %v339 = vpop.permute.xlu0 %338
    %v340 = vsel %vm193, %v339, 0
    %342 = vmatpush.msra.mxu0 0.0
    %343 = vmatpush.msra.mxu0 0.0
    %344 = vmatpush.msra.mxu0 0.0
    %345 = vmatpush.msra.mxu0 0.0
    %346 = vmatpush.msra.mxu0 0.0
    %347 = vmatpush.msra.mxu0 0.0
    %348 = vmatpush.msra.mxu0 0.0
    %349 = vmatpush.msra.mxu0 0.0
    %350 = vmatpush.msra.mxu0 0.0
    %351 = vmatpush.msra.mxu0 0.0
    %352 = vmatpush.msra.mxu0 0.0
    %353 = vmatpush.msra.mxu0 0.0
    %354 = vmatpush.msra.mxu0 %v188
    %355 = vmatpush.msra.mxu0 %v187
    %356 = vmatpush.msra.mxu0 %v186
    %357 = vmatpush.msra.mxu0 %v185
    %358 = vmatmul.f32.gmra.mxu0 %v340
    %v359 = vpop.f32.mrf.mxu0
    %v360 = vadd.f32 %v191, %v359
    %361 = vdwg.mxu0
    %362 = vmatpush.msra.mxu0 0.0
    %363 = vmatpush.msra.mxu0 0.0
    %364 = vmatpush.msra.mxu0 0.0
    %365 = vmatpush.msra.mxu0 0.0
    %366 = vmatpush.msra.mxu0 0.0
    %367 = vmatpush.msra.mxu0 0.0
    %368 = vmatpush.msra.mxu0 0.0
    %369 = vmatpush.msra.mxu0 0.0
    %370 = vmatpush.msra.mxu0 0.0
    %371 = vmatpush.msra.mxu0 0.0
    %372 = vmatpush.msra.mxu0 0.0
    %373 = vmatpush.msra.mxu0 0.0
    %374 = vmatpush.msra.mxu0 %v180
    %375 = vmatpush.msra.mxu0 %v179
    %376 = vmatpush.msra.mxu0 %v178
    %377 = vmatpush.msra.mxu0 %v177
    %378 = vmatmul.f32.gmra.mxu0 %v278
    %v379 = vpop.f32.mrf.mxu0
    %v380 = vadd.f32 0.0, %v379
    %381 = vdwg.mxu0
    %v382 = vadd.f32 %v157, %v380
    %v383 = vxor.u32 %v382, 2147483648
    %v384 = vmul.f32 %v383, 1.442695
    %v385 = vpow.pop %v384
    %v386 = vadd.f32 %v385, 1.0
    %v387 = vrcp.pop %v386
    %v388 = vmul.f32 %v386, %v387
    %v389 = vsub.f32 1.0, %v388
    %v390 = vmul.f32 %v387, %v389
    %v391 = vadd.f32 %v387, %v390
    %vm392 = vweird.f32 %v386
    %vm393 = vweird.f32 %v387
    %vm394 = vmor %vm392, %vm393
    %v395 = vsel %vm394, %v387, %v391
    %v396 = vand.u32 2147483647, %v386
    %vm397 = vcmp.eq.f32.partialorder %v396, 8.507059e+37
    %v398 = vand.u32 %v386, 2147483648
    %v399 = vor.u32 1.1754944e-38, %v398
    %v400 = vsel %vm397, %v399, %v395
    %v401 = vmul.f32 1.0, %v400
    %v402 = vtanh.pop %v382
    %v403 = vmul.f32 %v401, %v268
    %405 = vrot.lane.b32.xlu0 %v402, 64
    %v406 = vpop.permute.xlu0 %405
    %v408 = vmul.f32 %v401, %v406
    %410 = vrot.lane.b32.xlu0 %v408, 32
    %v411 = vpop.permute.xlu0 %410
    %v413 = vadd.f32 %v403, %v411
    %v414 = vtanh.pop %v413
    %416 = vrot.lane.b32.xlu0 %v414, 64
    %v417 = vpop.permute.xlu0 %416
    %v419 = vmul.f32 %v401, %v417
    %421 = vrot.lane.b32.xlu0 %v419, 32
    %v422 = vpop.permute.xlu0 %421
    %v423 = vsel %vm193, %v422, 0
    %425 = vmatpush.msra.mxu0 0.0
    %426 = vmatpush.msra.mxu0 0.0
    %427 = vmatpush.msra.mxu0 0.0
    %428 = vmatpush.msra.mxu0 0.0
    %429 = vmatpush.msra.mxu0 0.0
    %430 = vmatpush.msra.mxu0 0.0
    %431 = vmatpush.msra.mxu0 0.0
    %432 = vmatpush.msra.mxu0 0.0
    %433 = vmatpush.msra.mxu0 0.0
    %434 = vmatpush.msra.mxu0 0.0
    %435 = vmatpush.msra.mxu0 0.0
    %436 = vmatpush.msra.mxu0 0.0
    %437 = vmatpush.msra.mxu0 %v184
    %438 = vmatpush.msra.mxu0 %v183
    %439 = vmatpush.msra.mxu0 %v182
    %440 = vmatpush.msra.mxu0 %v181
    %441 = vmatmul.f32.gmra.mxu0 %v423
    %v442 = vpop.f32.mrf.mxu0
    %v443 = vadd.f32 %v360, %v442
    %444 = vdwg.mxu0
    %v445 = vxor.u32 %v443, 2147483648
    %v446 = vmul.f32 %v445, 1.442695
    %v447 = vpow.pop %v446
    %v448 = vadd.f32 %v447, 1.0
    %v449 = vrcp.pop %v448
    %v450 = vmul.f32 %v448, %v449
    %v451 = vsub.f32 1.0, %v450
    %v452 = vmul.f32 %v449, %v451
    %v453 = vadd.f32 %v449, %v452
    %vm454 = vweird.f32 %v448
    %vm455 = vweird.f32 %v449
    %vm456 = vmor %vm454, %vm455
    %v457 = vsel %vm456, %v449, %v453
    %v458 = vand.u32 2147483647, %v448
    %vm459 = vcmp.eq.f32.partialorder %v458, 8.507059e+37
    %v460 = vand.u32 %v448, 2147483648
    %v461 = vor.u32 1.1754944e-38, %v460
    %v462 = vsel %vm459, %v461, %v457
    %v463 = vmul.f32 1.0, %v462
    %v464 = vtanh.pop %v443
    %v465 = vmul.f32 %v463, %v330
    %467 = vrot.lane.b32.xlu0 %v464, 64
    %v468 = vpop.permute.xlu0 %467
    %v470 = vmul.f32 %v463, %v468
    %472 = vrot.lane.b32.xlu0 %v470, 32
    %v473 = vpop.permute.xlu0 %472
    %v475 = vadd.f32 %v465, %v473
    %v476 = vtanh.pop %v475
    %478 = vrot.lane.b32.xlu0 %v476, 64
    %v479 = vpop.permute.xlu0 %478
    %v481 = vmul.f32 %v463, %v479
    %483 = vrot.lane.b32.xlu0 %v481, 32
    %v484 = vpop.permute.xlu0 %483
    %v485 = vsel %vm193, %v484, 0
    %487 = vmatpush.msra.mxu0 0.0
    %488 = vmatpush.msra.mxu0 0.0
    %489 = vmatpush.msra.mxu0 0.0
    %490 = vmatpush.msra.mxu0 0.0
    %491 = vmatpush.msra.mxu0 0.0
    %492 = vmatpush.msra.mxu0 0.0
    %493 = vmatpush.msra.mxu0 0.0
    %494 = vmatpush.msra.mxu0 0.0
    %495 = vmatpush.msra.mxu0 0.0
    %496 = vmatpush.msra.mxu0 0.0
    %497 = vmatpush.msra.mxu0 0.0
    %498 = vmatpush.msra.mxu0 0.0
    %499 = vmatpush.msra.mxu0 %v188
    %500 = vmatpush.msra.mxu0 %v187
    %501 = vmatpush.msra.mxu0 %v186
    %502 = vmatpush.msra.mxu0 %v185
    %503 = vmatmul.f32.gmra.mxu0 %v485
    %v504 = vpop.f32.mrf.mxu0
    %v505 = vadd.f32 %v191, %v504
    %506 = vdwg.mxu0
    %507 = vmatpush.msra.mxu0 0.0
    %508 = vmatpush.msra.mxu0 0.0
    %509 = vmatpush.msra.mxu0 0.0
    %510 = vmatpush.msra.mxu0 0.0
    %511 = vmatpush.msra.mxu0 0.0
    %512 = vmatpush.msra.mxu0 0.0
    %513 = vmatpush.msra.mxu0 0.0
    %514 = vmatpush.msra.mxu0 0.0
    %515 = vmatpush.msra.mxu0 0.0
    %516 = vmatpush.msra.mxu0 0.0
    %517 = vmatpush.msra.mxu0 0.0
    %518 = vmatpush.msra.mxu0 0.0
    %519 = vmatpush.msra.mxu0 %v180
    %520 = vmatpush.msra.mxu0 %v179
    %521 = vmatpush.msra.mxu0 %v178
    %522 = vmatpush.msra.mxu0 %v177
    %523 = vmatmul.f32.gmra.mxu0 %v423
    %v524 = vpop.f32.mrf.mxu0
    %v525 = vadd.f32 0.0, %v524
    %526 = vdwg.mxu0
    %v527 = vadd.f32 %v160, %v525
    %v528 = vxor.u32 %v527, 2147483648
    %v529 = vmul.f32 %v528, 1.442695
    %v530 = vpow.pop %v529
    %v531 = vadd.f32 %v530, 1.0
    %v532 = vrcp.pop %v531
    %v533 = vmul.f32 %v531, %v532
    %v534 = vsub.f32 1.0, %v533
    %v535 = vmul.f32 %v532, %v534
    %v536 = vadd.f32 %v532, %v535
    %vm537 = vweird.f32 %v531
    %vm538 = vweird.f32 %v532
    %vm539 = vmor %vm537, %vm538
    %v540 = vsel %vm539, %v532, %v536
    %v541 = vand.u32 2147483647, %v531
    %vm542 = vcmp.eq.f32.partialorder %v541, 8.507059e+37
    %v543 = vand.u32 %v531, 2147483648
    %v544 = vor.u32 1.1754944e-38, %v543
    %v545 = vsel %vm542, %v544, %v540
    %v546 = vmul.f32 1.0, %v545
    %v547 = vtanh.pop %v527
    %v548 = vmul.f32 %v546, %v413
    %550 = vrot.lane.b32.xlu0 %v547, 64
    %v551 = vpop.permute.xlu0 %550
    %v553 = vmul.f32 %v546, %v551
    %555 = vrot.lane.b32.xlu0 %v553, 32
    %v556 = vpop.permute.xlu0 %555
    %v558 = vadd.f32 %v548, %v556
    %v559 = vtanh.pop %v558
    %561 = vrot.lane.b32.xlu0 %v559, 64
    %v562 = vpop.permute.xlu0 %561
    %v564 = vmul.f32 %v546, %v562
    %566 = vrot.lane.b32.xlu0 %v564, 32
    %v567 = vpop.permute.xlu0 %566
    %v568 = vsel %vm193, %v567, 0
    %570 = vmatpush.msra.mxu0 0.0
    %571 = vmatpush.msra.mxu0 0.0
    %572 = vmatpush.msra.mxu0 0.0
    %573 = vmatpush.msra.mxu0 0.0
    %574 = vmatpush.msra.mxu0 0.0
    %575 = vmatpush.msra.mxu0 0.0
    %576 = vmatpush.msra.mxu0 0.0
    %577 = vmatpush.msra.mxu0 0.0
    %578 = vmatpush.msra.mxu0 0.0
    %579 = vmatpush.msra.mxu0 0.0
    %580 = vmatpush.msra.mxu0 0.0
    %581 = vmatpush.msra.mxu0 0.0
    %582 = vmatpush.msra.mxu0 %v184
    %583 = vmatpush.msra.mxu0 %v183
    %584 = vmatpush.msra.mxu0 %v182
    %585 = vmatpush.msra.mxu0 %v181
    %586 = vmatmul.f32.gmra.mxu0 %v568
    %v587 = vpop.f32.mrf.mxu0
    %v588 = vadd.f32 %v505, %v587
    %589 = vdwg.mxu0
    %v590 = vxor.u32 %v588, 2147483648
    %v591 = vmul.f32 %v590, 1.442695
    %v592 = vpow.pop %v591
    %v593 = vadd.f32 %v592, 1.0
    %v594 = vrcp.pop %v593
    %v595 = vmul.f32 %v593, %v594
    %v596 = vsub.f32 1.0, %v595
    %v597 = vmul.f32 %v594, %v596
    %v598 = vadd.f32 %v594, %v597
    %vm599 = vweird.f32 %v593
    %vm600 = vweird.f32 %v594
    %vm601 = vmor %vm599, %vm600
    %v602 = vsel %vm601, %v594, %v598
    %v603 = vand.u32 2147483647, %v593
    %vm604 = vcmp.eq.f32.partialorder %v603, 8.507059e+37
    %v605 = vand.u32 %v593, 2147483648
    %v606 = vor.u32 1.1754944e-38, %v605
    %v607 = vsel %vm604, %v606, %v602
    %v608 = vmul.f32 1.0, %v607
    %v609 = vtanh.pop %v588
    %v610 = vmul.f32 %v608, %v475
    %612 = vrot.lane.b32.xlu0 %v609, 64
    %v613 = vpop.permute.xlu0 %612
    %v615 = vmul.f32 %v608, %v613
    %617 = vrot.lane.b32.xlu0 %v615, 32
    %v618 = vpop.permute.xlu0 %617
    %v620 = vadd.f32 %v610, %v618
    %v621 = vtanh.pop %v620
    %623 = vrot.lane.b32.xlu0 %v621, 64
    %v624 = vpop.permute.xlu0 %623
    %v626 = vmul.f32 %v608, %v624
    %628 = vrot.lane.b32.xlu0 %v626, 32
    %v629 = vpop.permute.xlu0 %628
    %v630 = vsel %vm193, %v629, 0
    %632 = vmatpush.msra.mxu0 0.0
    %633 = vmatpush.msra.mxu0 0.0
    %634 = vmatpush.msra.mxu0 0.0
    %635 = vmatpush.msra.mxu0 0.0
    %636 = vmatpush.msra.mxu0 0.0
    %637 = vmatpush.msra.mxu0 0.0
    %638 = vmatpush.msra.mxu0 0.0
    %639 = vmatpush.msra.mxu0 0.0
    %640 = vmatpush.msra.mxu0 0.0
    %641 = vmatpush.msra.mxu0 0.0
    %642 = vmatpush.msra.mxu0 0.0
    %643 = vmatpush.msra.mxu0 0.0
    %644 = vmatpush.msra.mxu0 %v188
    %645 = vmatpush.msra.mxu0 %v187
    %646 = vmatpush.msra.mxu0 %v186
    %647 = vmatpush.msra.mxu0 %v185
    %648 = vmatmul.f32.gmra.mxu0 %v630
    %v649 = vpop.f32.mrf.mxu0
    %v650 = vadd.f32 %v191, %v649
    %651 = vdwg.mxu0
    %652 = vmatpush.msra.mxu0 0.0
    %653 = vmatpush.msra.mxu0 0.0
    %654 = vmatpush.msra.mxu0 0.0
    %655 = vmatpush.msra.mxu0 0.0
    %656 = vmatpush.msra.mxu0 0.0
    %657 = vmatpush.msra.mxu0 0.0
    %658 = vmatpush.msra.mxu0 0.0
    %659 = vmatpush.msra.mxu0 0.0
    %660 = vmatpush.msra.mxu0 0.0
    %661 = vmatpush.msra.mxu0 0.0
    %662 = vmatpush.msra.mxu0 0.0
    %663 = vmatpush.msra.mxu0 0.0
    %664 = vmatpush.msra.mxu0 %v180
    %665 = vmatpush.msra.mxu0 %v179
    %666 = vmatpush.msra.mxu0 %v178
    %667 = vmatpush.msra.mxu0 %v177
    %668 = vmatmul.f32.gmra.mxu0 %v568
    %v669 = vpop.f32.mrf.mxu0
    %v670 = vadd.f32 0.0, %v669
    %671 = vdwg.mxu0
    %v672 = vadd.f32 %v163, %v670
    %v673 = vxor.u32 %v672, 2147483648
    %v674 = vmul.f32 %v673, 1.442695
    %v675 = vpow.pop %v674
    %v676 = vadd.f32 %v675, 1.0
    %v677 = vrcp.pop %v676
    %v678 = vmul.f32 %v676, %v677
    %v679 = vsub.f32 1.0, %v678
    %v680 = vmul.f32 %v677, %v679
    %v681 = vadd.f32 %v677, %v680
    %vm682 = vweird.f32 %v676
    %vm683 = vweird.f32 %v677
    %vm684 = vmor %vm682, %vm683
    %v685 = vsel %vm684, %v677, %v681
    %v686 = vand.u32 2147483647, %v676
    %vm687 = vcmp.eq.f32.partialorder %v686, 8.507059e+37
    %v688 = vand.u32 %v676, 2147483648
    %v689 = vor.u32 1.1754944e-38, %v688
    %v690 = vsel %vm687, %v689, %v685
    %v691 = vmul.f32 1.0, %v690
    %v692 = vtanh.pop %v672
    %v693 = vmul.f32 %v691, %v558
    %695 = vrot.lane.b32.xlu0 %v692, 64
    %v696 = vpop.permute.xlu0 %695
    %v698 = vmul.f32 %v691, %v696
    %700 = vrot.lane.b32.xlu0 %v698, 32
    %v701 = vpop.permute.xlu0 %700
    %v703 = vadd.f32 %v693, %v701
    %v704 = vtanh.pop %v703
    %706 = vrot.lane.b32.xlu0 %v704, 64
    %v707 = vpop.permute.xlu0 %706
    %v709 = vmul.f32 %v691, %v707
    %711 = vrot.lane.b32.xlu0 %v709, 32
    %v712 = vpop.permute.xlu0 %711
    %v713 = vsel %vm193, %v712, 0
    %715 = vmatpush.msra.mxu0 0.0
    %716 = vmatpush.msra.mxu0 0.0
    %717 = vmatpush.msra.mxu0 0.0
    %718 = vmatpush.msra.mxu0 0.0
    %719 = vmatpush.msra.mxu0 0.0
    %720 = vmatpush.msra.mxu0 0.0
    %721 = vmatpush.msra.mxu0 0.0
    %722 = vmatpush.msra.mxu0 0.0
    %723 = vmatpush.msra.mxu0 0.0
    %724 = vmatpush.msra.mxu0 0.0
    %725 = vmatpush.msra.mxu0 0.0
    %726 = vmatpush.msra.mxu0 0.0
    %727 = vmatpush.msra.mxu0 %v184
    %728 = vmatpush.msra.mxu0 %v183
    %729 = vmatpush.msra.mxu0 %v182
    %730 = vmatpush.msra.mxu0 %v181
    %731 = vmatmul.f32.gmra.mxu0 %v713
    %v732 = vpop.f32.mrf.mxu0
    %v733 = vadd.f32 %v650, %v732
    %734 = vdwg.mxu0
    %v735 = vxor.u32 %v733, 2147483648
    %v736 = vmul.f32 %v735, 1.442695
    %v737 = vpow.pop %v736
    %v738 = vadd.f32 %v737, 1.0
    %v739 = vrcp.pop %v738
    %v740 = vmul.f32 %v738, %v739
    %v741 = vsub.f32 1.0, %v740
    %v742 = vmul.f32 %v739, %v741
    %v743 = vadd.f32 %v739, %v742
    %vm744 = vweird.f32 %v738
    %vm745 = vweird.f32 %v739
    %vm746 = vmor %vm744, %vm745
    %v747 = vsel %vm746, %v739, %v743
    %v748 = vand.u32 2147483647, %v738
    %vm749 = vcmp.eq.f32.partialorder %v748, 8.507059e+37
    %v750 = vand.u32 %v738, 2147483648
    %v751 = vor.u32 1.1754944e-38, %v750
    %v752 = vsel %vm749, %v751, %v747
    %v753 = vmul.f32 1.0, %v752
    %v754 = vtanh.pop %v733
    %v755 = vmul.f32 %v753, %v620
    %757 = vrot.lane.b32.xlu0 %v754, 64
    %v758 = vpop.permute.xlu0 %757
    %v760 = vmul.f32 %v753, %v758
    %762 = vrot.lane.b32.xlu0 %v760, 32
    %v763 = vpop.permute.xlu0 %762
    %v765 = vadd.f32 %v755, %v763
    %v766 = vtanh.pop %v765
    %768 = vrot.lane.b32.xlu0 %v766, 64
    %v769 = vpop.permute.xlu0 %768
    %v771 = vmul.f32 %v753, %v769
    %773 = vrot.lane.b32.xlu0 %v771, 32
    %v774 = vpop.permute.xlu0 %773
    %v775 = vsel %vm193, %v774, 0
    %777 = vmatpush.msra.mxu0 0.0
    %778 = vmatpush.msra.mxu0 0.0
    %779 = vmatpush.msra.mxu0 0.0
    %780 = vmatpush.msra.mxu0 0.0
    %781 = vmatpush.msra.mxu0 0.0
    %782 = vmatpush.msra.mxu0 0.0
    %783 = vmatpush.msra.mxu0 0.0
    %784 = vmatpush.msra.mxu0 0.0
    %785 = vmatpush.msra.mxu0 0.0
    %786 = vmatpush.msra.mxu0 0.0
    %787 = vmatpush.msra.mxu0 0.0
    %788 = vmatpush.msra.mxu0 0.0
    %789 = vmatpush.msra.mxu0 %v188
    %790 = vmatpush.msra.mxu0 %v187
    %791 = vmatpush.msra.mxu0 %v186
    %792 = vmatpush.msra.mxu0 %v185
    %793 = vmatmul.f32.gmra.mxu0 %v775
    %v794 = vpop.f32.mrf.mxu0
    %v795 = vadd.f32 %v191, %v794
    %796 = vdwg.mxu0
    %797 = vmatpush.msra.mxu0 0.0
    %798 = vmatpush.msra.mxu0 0.0
    %799 = vmatpush.msra.mxu0 0.0
    %800 = vmatpush.msra.mxu0 0.0
    %801 = vmatpush.msra.mxu0 0.0
    %802 = vmatpush.msra.mxu0 0.0
    %803 = vmatpush.msra.mxu0 0.0
    %804 = vmatpush.msra.mxu0 0.0
    %805 = vmatpush.msra.mxu0 0.0
    %806 = vmatpush.msra.mxu0 0.0
    %807 = vmatpush.msra.mxu0 0.0
    %808 = vmatpush.msra.mxu0 0.0
    %809 = vmatpush.msra.mxu0 %v180
    %810 = vmatpush.msra.mxu0 %v179
    %811 = vmatpush.msra.mxu0 %v178
    %812 = vmatpush.msra.mxu0 %v177
    %813 = vmatmul.f32.gmra.mxu0 %v713
    %v814 = vpop.f32.mrf.mxu0
    %v815 = vadd.f32 0.0, %v814
    %816 = vdwg.mxu0
    %v817 = vadd.f32 %v166, %v815
    %v818 = vxor.u32 %v817, 2147483648
    %v819 = vmul.f32 %v818, 1.442695
    %v820 = vpow.pop %v819
    %v821 = vadd.f32 %v820, 1.0
    %v822 = vrcp.pop %v821
    %v823 = vmul.f32 %v821, %v822
    %v824 = vsub.f32 1.0, %v823
    %v825 = vmul.f32 %v822, %v824
    %v826 = vadd.f32 %v822, %v825
    %vm827 = vweird.f32 %v821
    %vm828 = vweird.f32 %v822
    %vm829 = vmor %vm827, %vm828
    %v830 = vsel %vm829, %v822, %v826
    %v831 = vand.u32 2147483647, %v821
    %vm832 = vcmp.eq.f32.partialorder %v831, 8.507059e+37
    %v833 = vand.u32 %v821, 2147483648
    %v834 = vor.u32 1.1754944e-38, %v833
    %v835 = vsel %vm832, %v834, %v830
    %v836 = vmul.f32 1.0, %v835
    %v837 = vtanh.pop %v817
    %v838 = vmul.f32 %v836, %v703
    %840 = vrot.lane.b32.xlu0 %v837, 64
    %v841 = vpop.permute.xlu0 %840
    %v843 = vmul.f32 %v836, %v841
    %845 = vrot.lane.b32.xlu0 %v843, 32
    %v846 = vpop.permute.xlu0 %845
    %v848 = vadd.f32 %v838, %v846
    %v849 = vtanh.pop %v848
    %851 = vrot.lane.b32.xlu0 %v849, 64
    %v852 = vpop.permute.xlu0 %851
    %v854 = vmul.f32 %v836, %v852
    %856 = vrot.lane.b32.xlu0 %v854, 32
    %v857 = vpop.permute.xlu0 %856
    %v858 = vsel %vm193, %v857, 0
    %860 = vmatpush.msra.mxu0 0.0
    %861 = vmatpush.msra.mxu0 0.0
    %862 = vmatpush.msra.mxu0 0.0
    %863 = vmatpush.msra.mxu0 0.0
    %864 = vmatpush.msra.mxu0 0.0
    %865 = vmatpush.msra.mxu0 0.0
    %866 = vmatpush.msra.mxu0 0.0
    %867 = vmatpush.msra.mxu0 0.0
    %868 = vmatpush.msra.mxu0 0.0
    %869 = vmatpush.msra.mxu0 0.0
    %870 = vmatpush.msra.mxu0 0.0
    %871 = vmatpush.msra.mxu0 0.0
    %872 = vmatpush.msra.mxu0 %v184
    %873 = vmatpush.msra.mxu0 %v183
    %874 = vmatpush.msra.mxu0 %v182
    %875 = vmatpush.msra.mxu0 %v181
    %876 = vmatmul.f32.gmra.mxu0 %v858
    %v877 = vpop.f32.mrf.mxu0
    %v878 = vadd.f32 %v795, %v877
    %879 = vdwg.mxu0
    %v880 = vxor.u32 %v878, 2147483648
    %v881 = vmul.f32 %v880, 1.442695
    %v882 = vpow.pop %v881
    %v883 = vadd.f32 %v882, 1.0
    %v884 = vrcp.pop %v883
    %v885 = vmul.f32 %v883, %v884
    %v886 = vsub.f32 1.0, %v885
    %v887 = vmul.f32 %v884, %v886
    %v888 = vadd.f32 %v884, %v887
    %vm889 = vweird.f32 %v883
    %vm890 = vweird.f32 %v884
    %vm891 = vmor %vm889, %vm890
    %v892 = vsel %vm891, %v884, %v888
    %v893 = vand.u32 2147483647, %v883
    %vm894 = vcmp.eq.f32.partialorder %v893, 8.507059e+37
    %v895 = vand.u32 %v883, 2147483648
    %v896 = vor.u32 1.1754944e-38, %v895
    %v897 = vsel %vm894, %v896, %v892
    %v898 = vmul.f32 1.0, %v897
    %v899 = vtanh.pop %v878
    %v900 = vmul.f32 %v898, %v765
    %902 = vrot.lane.b32.xlu0 %v899, 64
    %v903 = vpop.permute.xlu0 %902
    %v905 = vmul.f32 %v898, %v903
    %907 = vrot.lane.b32.xlu0 %v905, 32
    %v908 = vpop.permute.xlu0 %907
    %v910 = vadd.f32 %v900, %v908
    %v911 = vtanh.pop %v910
    %913 = vrot.lane.b32.xlu0 %v911, 64
    %v914 = vpop.permute.xlu0 %913
    %v916 = vmul.f32 %v898, %v914
    %918 = vrot.lane.b32.xlu0 %v916, 32
    %v919 = vpop.permute.xlu0 %918
    %v920 = vsel %vm193, %v919, 0
    %922 = vmatpush.msra.mxu0 0.0
    %923 = vmatpush.msra.mxu0 0.0
    %924 = vmatpush.msra.mxu0 0.0
    %925 = vmatpush.msra.mxu0 0.0
    %926 = vmatpush.msra.mxu0 0.0
    %927 = vmatpush.msra.mxu0 0.0
    %928 = vmatpush.msra.mxu0 0.0
    %929 = vmatpush.msra.mxu0 0.0
    %930 = vmatpush.msra.mxu0 0.0
    %931 = vmatpush.msra.mxu0 0.0
    %932 = vmatpush.msra.mxu0 0.0
    %933 = vmatpush.msra.mxu0 0.0
    %934 = vmatpush.msra.mxu0 %v188
    %935 = vmatpush.msra.mxu0 %v187
    %936 = vmatpush.msra.mxu0 %v186
    %937 = vmatpush.msra.mxu0 %v185
    %938 = vmatmul.f32.gmra.mxu0 %v920
    %v939 = vpop.f32.mrf.mxu0
    %v940 = vadd.f32 %v191, %v939
    %941 = vdwg.mxu0
    %942 = vmatpush.msra.mxu0 0.0
    %943 = vmatpush.msra.mxu0 0.0
    %944 = vmatpush.msra.mxu0 0.0
    %945 = vmatpush.msra.mxu0 0.0
    %946 = vmatpush.msra.mxu0 0.0
    %947 = vmatpush.msra.mxu0 0.0
    %948 = vmatpush.msra.mxu0 0.0
    %949 = vmatpush.msra.mxu0 0.0
    %950 = vmatpush.msra.mxu0 0.0
    %951 = vmatpush.msra.mxu0 0.0
    %952 = vmatpush.msra.mxu0 0.0
    %953 = vmatpush.msra.mxu0 0.0
    %954 = vmatpush.msra.mxu0 %v180
    %955 = vmatpush.msra.mxu0 %v179
    %956 = vmatpush.msra.mxu0 %v178
    %957 = vmatpush.msra.mxu0 %v177
    %958 = vmatmul.f32.gmra.mxu0 %v858
    %v959 = vpop.f32.mrf.mxu0
    %v960 = vadd.f32 0.0, %v959
    %961 = vdwg.mxu0
    %v962 = vadd.f32 %v169, %v960
    %v963 = vxor.u32 %v962, 2147483648
    %v964 = vmul.f32 %v963, 1.442695
    %v965 = vpow.pop %v964
    %v966 = vadd.f32 %v965, 1.0
    %v967 = vrcp.pop %v966
    %v968 = vmul.f32 %v966, %v967
    %v969 = vsub.f32 1.0, %v968
    %v970 = vmul.f32 %v967, %v969
    %v971 = vadd.f32 %v967, %v970
    %vm972 = vweird.f32 %v966
    %vm973 = vweird.f32 %v967
    %vm974 = vmor %vm972, %vm973
    %v975 = vsel %vm974, %v967, %v971
    %v976 = vand.u32 2147483647, %v966
    %vm977 = vcmp.eq.f32.partialorder %v976, 8.507059e+37
    %v978 = vand.u32 %v966, 2147483648
    %v979 = vor.u32 1.1754944e-38, %v978
    %v980 = vsel %vm977, %v979, %v975
    %v981 = vmul.f32 1.0, %v980
    %v982 = vtanh.pop %v962
    %v983 = vmul.f32 %v981, %v848
    %985 = vrot.lane.b32.xlu0 %v982, 64
    %v986 = vpop.permute.xlu0 %985
    %v988 = vmul.f32 %v981, %v986
    %990 = vrot.lane.b32.xlu0 %v988, 32
    %v991 = vpop.permute.xlu0 %990
    %v993 = vadd.f32 %v983, %v991
    %v994 = vtanh.pop %v993
    %996 = vrot.lane.b32.xlu0 %v994, 64
    %v997 = vpop.permute.xlu0 %996
    %v999 = vmul.f32 %v981, %v997
    %1001 = vrot.lane.b32.xlu0 %v999, 32
    %v1002 = vpop.permute.xlu0 %1001
    %v1003 = vsel %vm193, %v1002, 0
    %1005 = vmatpush.msra.mxu0 0.0
    %1006 = vmatpush.msra.mxu0 0.0
    %1007 = vmatpush.msra.mxu0 0.0
    %1008 = vmatpush.msra.mxu0 0.0
    %1009 = vmatpush.msra.mxu0 0.0
    %1010 = vmatpush.msra.mxu0 0.0
    %1011 = vmatpush.msra.mxu0 0.0
    %1012 = vmatpush.msra.mxu0 0.0
    %1013 = vmatpush.msra.mxu0 0.0
    %1014 = vmatpush.msra.mxu0 0.0
    %1015 = vmatpush.msra.mxu0 0.0
    %1016 = vmatpush.msra.mxu0 0.0
    %1017 = vmatpush.msra.mxu0 %v184
    %1018 = vmatpush.msra.mxu0 %v183
    %1019 = vmatpush.msra.mxu0 %v182
    %1020 = vmatpush.msra.mxu0 %v181
    %1021 = vmatmul.f32.gmra.mxu0 %v1003
    %v1022 = vpop.f32.mrf.mxu0
    %v1023 = vadd.f32 %v940, %v1022
    %1024 = vdwg.mxu0
    %v1025 = vxor.u32 %v1023, 2147483648
    %v1026 = vmul.f32 %v1025, 1.442695
    %v1027 = vpow.pop %v1026
    %v1028 = vadd.f32 %v1027, 1.0
    %v1029 = vrcp.pop %v1028
    %v1030 = vmul.f32 %v1028, %v1029
    %v1031 = vsub.f32 1.0, %v1030
    %v1032 = vmul.f32 %v1029, %v1031
    %v1033 = vadd.f32 %v1029, %v1032
    %vm1034 = vweird.f32 %v1028
    %vm1035 = vweird.f32 %v1029
    %vm1036 = vmor %vm1034, %vm1035
    %v1037 = vsel %vm1036, %v1029, %v1033
    %v1038 = vand.u32 2147483647, %v1028
    %vm1039 = vcmp.eq.f32.partialorder %v1038, 8.507059e+37
    %v1040 = vand.u32 %v1028, 2147483648
    %v1041 = vor.u32 1.1754944e-38, %v1040
    %v1042 = vsel %vm1039, %v1041, %v1037
    %v1043 = vmul.f32 1.0, %v1042
    %v1044 = vtanh.pop %v1023
    %v1045 = vmul.f32 %v1043, %v910
    %1047 = vrot.lane.b32.xlu0 %v1044, 64
    %v1048 = vpop.permute.xlu0 %1047
    %v1050 = vmul.f32 %v1043, %v1048
    %1052 = vrot.lane.b32.xlu0 %v1050, 32
    %v1053 = vpop.permute.xlu0 %1052
    %v1055 = vadd.f32 %v1045, %v1053
    %v1056 = vtanh.pop %v1055
    %1058 = vrot.lane.b32.xlu0 %v1056, 64
    %v1059 = vpop.permute.xlu0 %1058
    %v1061 = vmul.f32 %v1043, %v1059
    %1063 = vrot.lane.b32.xlu0 %v1061, 32
    %v1064 = vpop.permute.xlu0 %1063
    %v1065 = vsel %vm193, %v1064, 0
    %1067 = vmatpush.msra.mxu0 0.0
    %1068 = vmatpush.msra.mxu0 0.0
    %1069 = vmatpush.msra.mxu0 0.0
    %1070 = vmatpush.msra.mxu0 0.0
    %1071 = vmatpush.msra.mxu0 0.0
    %1072 = vmatpush.msra.mxu0 0.0
    %1073 = vmatpush.msra.mxu0 0.0
    %1074 = vmatpush.msra.mxu0 0.0
    %1075 = vmatpush.msra.mxu0 0.0
    %1076 = vmatpush.msra.mxu0 0.0
    %1077 = vmatpush.msra.mxu0 0.0
    %1078 = vmatpush.msra.mxu0 0.0
    %1079 = vmatpush.msra.mxu0 %v188
    %1080 = vmatpush.msra.mxu0 %v187
    %1081 = vmatpush.msra.mxu0 %v186
    %1082 = vmatpush.msra.mxu0 %v185
    %1083 = vmatmul.f32.gmra.mxu0 %v1065
    %v1084 = vpop.f32.mrf.mxu0
    %v1085 = vadd.f32 %v191, %v1084
    %1086 = vdwg.mxu0
    %1087 = vmatpush.msra.mxu0 0.0
    %1088 = vmatpush.msra.mxu0 0.0
    %1089 = vmatpush.msra.mxu0 0.0
    %1090 = vmatpush.msra.mxu0 0.0
    %1091 = vmatpush.msra.mxu0 0.0
    %1092 = vmatpush.msra.mxu0 0.0
    %1093 = vmatpush.msra.mxu0 0.0
    %1094 = vmatpush.msra.mxu0 0.0
    %1095 = vmatpush.msra.mxu0 0.0
    %1096 = vmatpush.msra.mxu0 0.0
    %1097 = vmatpush.msra.mxu0 0.0
    %1098 = vmatpush.msra.mxu0 0.0
    %1099 = vmatpush.msra.mxu0 %v180
    %1100 = vmatpush.msra.mxu0 %v179
    %1101 = vmatpush.msra.mxu0 %v178
    %1102 = vmatpush.msra.mxu0 %v177
    %1103 = vmatmul.f32.gmra.mxu0 %v1003
    %v1104 = vpop.f32.mrf.mxu0
    %v1105 = vadd.f32 0.0, %v1104
    %1106 = vdwg.mxu0
    %v1107 = vadd.f32 %v172, %v1105
    %v1108 = vxor.u32 %v1107, 2147483648
    %v1109 = vmul.f32 %v1108, 1.442695
    %v1110 = vpow.pop %v1109
    %v1111 = vadd.f32 %v1110, 1.0
    %v1112 = vrcp.pop %v1111
    %v1113 = vmul.f32 %v1111, %v1112
    %v1114 = vsub.f32 1.0, %v1113
    %v1115 = vmul.f32 %v1112, %v1114
    %v1116 = vadd.f32 %v1112, %v1115
    %vm1117 = vweird.f32 %v1111
    %vm1118 = vweird.f32 %v1112
    %vm1119 = vmor %vm1117, %vm1118
    %v1120 = vsel %vm1119, %v1112, %v1116
    %v1121 = vand.u32 2147483647, %v1111
    %vm1122 = vcmp.eq.f32.partialorder %v1121, 8.507059e+37
    %v1123 = vand.u32 %v1111, 2147483648
    %v1124 = vor.u32 1.1754944e-38, %v1123
    %v1125 = vsel %vm1122, %v1124, %v1120
    %v1126 = vmul.f32 1.0, %v1125
    %v1127 = vtanh.pop %v1107
    %v1128 = vmul.f32 %v1126, %v993
    %1130 = vrot.lane.b32.xlu0 %v1127, 64
    %v1131 = vpop.permute.xlu0 %1130
    %v1133 = vmul.f32 %v1126, %v1131
    %1135 = vrot.lane.b32.xlu0 %v1133, 32
    %v1136 = vpop.permute.xlu0 %1135
    %v1138 = vadd.f32 %v1128, %v1136
    %v1139 = vtanh.pop %v1138
    %1141 = vrot.lane.b32.xlu0 %v1139, 64
    %v1142 = vpop.permute.xlu0 %1141
    %v1144 = vmul.f32 %v1126, %v1142
    %1146 = vrot.lane.b32.xlu0 %v1144, 32
    %v1147 = vpop.permute.xlu0 %1146
    %v1148 = vsel %vm193, %v1147, 0
    %1150 = vmatpush.msra.mxu0 0.0
    %1151 = vmatpush.msra.mxu0 0.0
    %1152 = vmatpush.msra.mxu0 0.0
    %1153 = vmatpush.msra.mxu0 0.0
    %1154 = vmatpush.msra.mxu0 0.0
    %1155 = vmatpush.msra.mxu0 0.0
    %1156 = vmatpush.msra.mxu0 0.0
    %1157 = vmatpush.msra.mxu0 0.0
    %1158 = vmatpush.msra.mxu0 0.0
    %1159 = vmatpush.msra.mxu0 0.0
    %1160 = vmatpush.msra.mxu0 0.0
    %1161 = vmatpush.msra.mxu0 0.0
    %1162 = vmatpush.msra.mxu0 %v184
    %1163 = vmatpush.msra.mxu0 %v183
    %1164 = vmatpush.msra.mxu0 %v182
    %1165 = vmatpush.msra.mxu0 %v181
    %1166 = vmatmul.f32.gmra.mxu0 %v1148
    %v1167 = vpop.f32.mrf.mxu0
    %v1168 = vadd.f32 %v1085, %v1167
    %1169 = vdwg.mxu0
    %v1170 = vxor.u32 %v1168, 2147483648
    %v1171 = vmul.f32 %v1170, 1.442695
    %v1172 = vpow.pop %v1171
    %v1173 = vadd.f32 %v1172, 1.0
    %v1174 = vrcp.pop %v1173
    %v1175 = vmul.f32 %v1173, %v1174
    %v1176 = vsub.f32 1.0, %v1175
    %v1177 = vmul.f32 %v1174, %v1176
    %v1178 = vadd.f32 %v1174, %v1177
    %vm1179 = vweird.f32 %v1173
    %vm1180 = vweird.f32 %v1174
    %vm1181 = vmor %vm1179, %vm1180
    %v1182 = vsel %vm1181, %v1174, %v1178
    %v1183 = vand.u32 2147483647, %v1173
    %vm1184 = vcmp.eq.f32.partialorder %v1183, 8.507059e+37
    %v1185 = vand.u32 %v1173, 2147483648
    %v1186 = vor.u32 1.1754944e-38, %v1185
    %v1187 = vsel %vm1184, %v1186, %v1182
    %v1188 = vmul.f32 1.0, %v1187
    %v1189 = vtanh.pop %v1168
    %v1190 = vmul.f32 %v1188, %v1055
    %1192 = vrot.lane.b32.xlu0 %v1189, 64
    %v1193 = vpop.permute.xlu0 %1192
    %v1195 = vmul.f32 %v1188, %v1193
    %1197 = vrot.lane.b32.xlu0 %v1195, 32
    %v1198 = vpop.permute.xlu0 %1197
    %v1200 = vadd.f32 %v1190, %v1198
    %v1201 = vtanh.pop %v1200
    %1203 = vrot.lane.b32.xlu0 %v1201, 64
    %v1204 = vpop.permute.xlu0 %1203
    %v1206 = vmul.f32 %v1188, %v1204
    %1208 = vrot.lane.b32.xlu0 %v1206, 32
    %v1209 = vpop.permute.xlu0 %1208
    %v1210 = vsel %vm193, %v1209, 0
    %1212 = vmatpush.msra.mxu0 0.0
    %1213 = vmatpush.msra.mxu0 0.0
    %1214 = vmatpush.msra.mxu0 0.0
    %1215 = vmatpush.msra.mxu0 0.0
    %1216 = vmatpush.msra.mxu0 0.0
    %1217 = vmatpush.msra.mxu0 0.0
    %1218 = vmatpush.msra.mxu0 0.0
    %1219 = vmatpush.msra.mxu0 0.0
    %1220 = vmatpush.msra.mxu0 0.0
    %1221 = vmatpush.msra.mxu0 0.0
    %1222 = vmatpush.msra.mxu0 0.0
    %1223 = vmatpush.msra.mxu0 0.0
    %1224 = vmatpush.msra.mxu0 %v188
    %1225 = vmatpush.msra.mxu0 %v187
    %1226 = vmatpush.msra.mxu0 %v186
    %1227 = vmatpush.msra.mxu0 %v185
    %1228 = vmatmul.f32.gmra.mxu0 %v1210
    %v1229 = vpop.f32.mrf.mxu0
    %v1230 = vadd.f32 %v191, %v1229
    %1231 = vdwg.mxu0
    %1232 = vmatpush.msra.mxu0 0.0
    %1233 = vmatpush.msra.mxu0 0.0
    %1234 = vmatpush.msra.mxu0 0.0
    %1235 = vmatpush.msra.mxu0 0.0
    %1236 = vmatpush.msra.mxu0 0.0
    %1237 = vmatpush.msra.mxu0 0.0
    %1238 = vmatpush.msra.mxu0 0.0
    %1239 = vmatpush.msra.mxu0 0.0
    %1240 = vmatpush.msra.mxu0 0.0
    %1241 = vmatpush.msra.mxu0 0.0
    %1242 = vmatpush.msra.mxu0 0.0
    %1243 = vmatpush.msra.mxu0 0.0
    %1244 = vmatpush.msra.mxu0 %v180
    %1245 = vmatpush.msra.mxu0 %v179
    %1246 = vmatpush.msra.mxu0 %v178
    %1247 = vmatpush.msra.mxu0 %v177
    %1248 = vmatmul.f32.gmra.mxu0 %v1148
    %v1249 = vpop.f32.mrf.mxu0
    %v1250 = vadd.f32 0.0, %v1249
    %1251 = vdwg.mxu0
    %v1252 = vadd.f32 %v175, %v1250
    %v1253 = vxor.u32 %v1252, 2147483648
    %v1254 = vmul.f32 %v1253, 1.442695
    %v1255 = vpow.pop %v1254
    %v1256 = vadd.f32 %v1255, 1.0
    %v1257 = vrcp.pop %v1256
    %v1258 = vmul.f32 %v1256, %v1257
    %v1259 = vsub.f32 1.0, %v1258
    %v1260 = vmul.f32 %v1257, %v1259
    %v1261 = vadd.f32 %v1257, %v1260
    %vm1262 = vweird.f32 %v1256
    %vm1263 = vweird.f32 %v1257
    %vm1264 = vmor %vm1262, %vm1263
    %v1265 = vsel %vm1264, %v1257, %v1261
    %v1266 = vand.u32 2147483647, %v1256
    %vm1267 = vcmp.eq.f32.partialorder %v1266, 8.507059e+37
    %v1268 = vand.u32 %v1256, 2147483648
    %v1269 = vor.u32 1.1754944e-38, %v1268
    %v1270 = vsel %vm1267, %v1269, %v1265
    %v1271 = vmul.f32 1.0, %v1270
    %v1272 = vtanh.pop %v1252
    %v1273 = vmul.f32 %v1271, %v1138
    %1275 = vrot.lane.b32.xlu0 %v1272, 64
    %v1276 = vpop.permute.xlu0 %1275
    %v1278 = vmul.f32 %v1271, %v1276
    %1280 = vrot.lane.b32.xlu0 %v1278, 32
    %v1281 = vpop.permute.xlu0 %1280
    %v1283 = vadd.f32 %v1273, %v1281
    %v1284 = vtanh.pop %v1283
    %1286 = vrot.lane.b32.xlu0 %v1284, 64
    %v1287 = vpop.permute.xlu0 %1286
    %v1289 = vmul.f32 %v1271, %v1287
    %1291 = vrot.lane.b32.xlu0 %v1289, 32
    %v1292 = vpop.permute.xlu0 %1291
    %v1293 = vsel %vm193, %v1292, 0
    %1295 = vmatpush.msra.mxu0 0.0
    %1296 = vmatpush.msra.mxu0 0.0
    %1297 = vmatpush.msra.mxu0 0.0
    %1298 = vmatpush.msra.mxu0 0.0
    %1299 = vmatpush.msra.mxu0 0.0
    %1300 = vmatpush.msra.mxu0 0.0
    %1301 = vmatpush.msra.mxu0 0.0
    %1302 = vmatpush.msra.mxu0 0.0
    %1303 = vmatpush.msra.mxu0 0.0
    %1304 = vmatpush.msra.mxu0 0.0
    %1305 = vmatpush.msra.mxu0 0.0
    %1306 = vmatpush.msra.mxu0 0.0
    %1307 = vmatpush.msra.mxu0 %v184
    %1308 = vmatpush.msra.mxu0 %v183
    %1309 = vmatpush.msra.mxu0 %v182
    %1310 = vmatpush.msra.mxu0 %v181
    %1311 = vmatmul.f32.gmra.mxu0 %v1293
    %v1312 = vpop.f32.mrf.mxu0
    %v1313 = vadd.f32 %v1230, %v1312
    %1314 = vdwg.mxu0
    %v1315 = vxor.u32 %v1313, 2147483648
    %v1316 = vmul.f32 %v1315, 1.442695
    %v1317 = vpow.pop %v1316
    %v1318 = vadd.f32 %v1317, 1.0
    %v1319 = vrcp.pop %v1318
    %v1320 = vmul.f32 %v1318, %v1319
    %v1321 = vsub.f32 1.0, %v1320
    %v1322 = vmul.f32 %v1319, %v1321
    %v1323 = vadd.f32 %v1319, %v1322
    %vm1324 = vweird.f32 %v1318
    %vm1325 = vweird.f32 %v1319
    %vm1326 = vmor %vm1324, %vm1325
    %v1327 = vsel %vm1326, %v1319, %v1323
    %v1328 = vand.u32 2147483647, %v1318
    %vm1329 = vcmp.eq.f32.partialorder %v1328, 8.507059e+37
    %v1330 = vand.u32 %v1318, 2147483648
    %v1331 = vor.u32 1.1754944e-38, %v1330
    %v1332 = vsel %vm1329, %v1331, %v1327
    %v1333 = vmul.f32 1.0, %v1332
    %v1334 = vtanh.pop %v1313
    %v1335 = vmul.f32 %v1333, %v1200
    %1337 = vrot.lane.b32.xlu0 %v1334, 64
    %v1338 = vpop.permute.xlu0 %1337
    %v1340 = vmul.f32 %v1333, %v1338
    %1342 = vrot.lane.b32.xlu0 %v1340, 32
    %v1343 = vpop.permute.xlu0 %1342
    %v1345 = vadd.f32 %v1335, %v1343
    %v1346 = vtanh.pop %v1345
    %1348 = vrot.lane.b32.xlu0 %v1346, 64
    %v1349 = vpop.permute.xlu0 %1348
    %v1351 = vmul.f32 %v1333, %v1349
    %v1352 = vld [vmem:[#allocation6] sm:$0xff]
    %v1353 = vld [vmem:[#allocation6 + $0x8] sm:$0xff]
    %v1354 = vld [vmem:[#allocation6 + $0x10] sm:$0xff]
    %v1355 = vld [vmem:[#allocation6 + $0x18] sm:$0xff]
    %v1356 = vld [vmem:[#allocation7] sm:$0x1]
    %v1358 = vperm.slane %v1356, 0
    %1361 = vrot.lane.b32.xlu0 %v1351, 32
    %v1362 = vpop.permute.xlu0 %1361
    %v1363 = vsel %vm193, %v1362, 0
    %1365 = vmatpush.msra.mxu0 0.0
    %1366 = vmatpush.msra.mxu0 0.0
    %1367 = vmatpush.msra.mxu0 0.0
    %1368 = vmatpush.msra.mxu0 0.0
    %1369 = vmatpush.msra.mxu0 0.0
    %1370 = vmatpush.msra.mxu0 0.0
    %1371 = vmatpush.msra.mxu0 0.0
    %1372 = vmatpush.msra.mxu0 0.0
    %1373 = vmatpush.msra.mxu0 0.0
    %1374 = vmatpush.msra.mxu0 0.0
    %1375 = vmatpush.msra.mxu0 0.0
    %1376 = vmatpush.msra.mxu0 0.0
    %1377 = vmatpush.msra.mxu0 %v1355
    %1378 = vmatpush.msra.mxu0 %v1354
    %1379 = vmatpush.msra.mxu0 %v1353
    %1380 = vmatpush.msra.mxu0 %v1352
    %1381 = vmatmul.f32.gmra.mxu0 %v1363
    %v1382 = vpop.f32.mrf.mxu0
    %v1383 = vadd.f32 %v1358, %v1382
    %1384 = vdwg.mxu0
    %1385 = vst [vmem:[%s9] sm:$0xff] %v1383
    // Predicated region
    $region54: #{encoder_forward.1} parent=1 // pred_check
      _
    $region55: #{encoder_forward.1} parent=1 // pred_check_branch
      %1387 = sbr.rel (0) target = $region57
    $region56: #{encoder_forward.1} parent=1 // pred_region
      _
    $region57: #{encoder_forward.1} parent=1 // pred_fallthru
      _
    // Predicated region
    $region58: #{encoder_forward.1} parent=1 // pred_check
      _
    $region59: #{encoder_forward.1} parent=1 // pred_check_branch
      %1389 = sbr.rel (0) target = $region61
    $region60: #{encoder_forward.1} parent=1 // pred_region
      _
    $region61: #{encoder_forward.1} parent=1 // pred_fallthru
      _
    %1390 = vsyncpa [#allocation3], 1
    %1391 = vsyncpa [#allocation5], 1
    %1392 = vsyncpa [#allocation8], 1

</llo_original>
